<compile_context>
chip_gen: v5e
topology: v5e:2x2
jax: 0.10.0
libtpu: 0.0.40
codegen_flags: <defaults>
</compile_context>

<pallas_src>
import functools

import jax
import jax.numpy as jnp
from jax import lax
from jax.experimental import pallas as pl
from jax.experimental.pallas import tpu as pltpu

LN_EPS = 1e-5       # PyTorch nn.LayerNorm default eps
LANE = 128          # lane-dense padding target
ROW_TILE = 512      # row tile for all fused MLP calls

_VMEM_LIMIT = None


def _vmem_limit_bytes():
    """Device-aware scoped-VMEM limit: capacity - 16 MiB, capped at 100 MiB."""
    global _VMEM_LIMIT
    if _VMEM_LIMIT is None:
        cap = 64 * 1024 * 1024
        try:
            cap = int(pltpu.get_tpu_info().vmem_capacity_bytes)
        except Exception:
            pass
        _VMEM_LIMIT = int(min(max(cap - 16 * 2**20, 32 * 2**20), 100 * 2**20))
    return _VMEM_LIMIT


def _round_up(n, m):
    return ((n + m - 1) // m) * m


def _pad_last(a, to):
    if a.shape[-1] == to:
        return a
    pad = [(0, 0)] * (a.ndim - 1) + [(0, to - a.shape[-1])]
    return jnp.pad(a, pad)


def _pad_first(a, to):
    if a.shape[0] == to:
        return a
    pad = [(0, to - a.shape[0])] + [(0, 0)] * (a.ndim - 1)
    return jnp.pad(a, pad)


# ----------------------------------------------------------------------------
# Generic fused MLP block kernel
#   h   = relu( sum_k feats[k] @ W1[k] + b1 )
#   h   = relu( h @ Wh + bh )            # n_extra times
#   y   = h @ W_out + b_out
#   y   = masked LayerNorm(y) over ln_valid lanes          (if has_ln)
#   y   = y + feats[res_idx]                               (if res_idx set)
# ----------------------------------------------------------------------------
def _mlp_block_kernel(*refs, n_feat, n_extra, has_ln, res_idx, ln_valid):
    o_ref = refs[-1]
    pos = 0
    feat_refs = refs[pos:pos + n_feat]; pos += n_feat
    w1_refs = refs[pos:pos + n_feat]; pos += n_feat
    b1_ref = refs[pos]; pos += 1
    extra_refs = refs[pos:pos + 2 * n_extra]; pos += 2 * n_extra
    wo_ref = refs[pos]; bo_ref = refs[pos + 1]; pos += 2
    if has_ln:
        g_ref = refs[pos]; bt_ref = refs[pos + 1]; pos += 2

    acc = None
    res_val = None
    for k in range(n_feat):
        fk = feat_refs[k][...]
        if res_idx is not None and k == res_idx:
            res_val = fk.astype(jnp.float32)      # residual reuses the loaded feat
        d = jnp.dot(fk.astype(jnp.bfloat16), w1_refs[k][...],
                    preferred_element_type=jnp.float32)
        acc = d if acc is None else acc + d
    h = jnp.maximum(acc + b1_ref[...], 0.0)

    for t in range(n_extra):
        w = extra_refs[2 * t][...]
        b = extra_refs[2 * t + 1][...]
        h = jnp.dot(h.astype(jnp.bfloat16), w,
                    preferred_element_type=jnp.float32) + b
        h = jnp.maximum(h, 0.0)

    y = jnp.dot(h.astype(jnp.bfloat16), wo_ref[...],
                preferred_element_type=jnp.float32) + bo_ref[...]

    if has_ln:
        dp = y.shape[-1]
        if ln_valid == dp:                         # no lane padding
            mean = jnp.mean(y, axis=-1, keepdims=True)
            diff = y - mean
            var = jnp.mean(diff * diff, axis=-1, keepdims=True)
        else:                                      # masked LN over true lanes
            mask = (lax.broadcasted_iota(jnp.int32, (1, dp), 1) < ln_valid
                    ).astype(jnp.float32)
            inv = 1.0 / float(ln_valid)
            mean = jnp.sum(y * mask, axis=-1, keepdims=True) * inv
            diff = (y - mean) * mask
            var = jnp.sum(diff * diff, axis=-1, keepdims=True) * inv
        y = diff * lax.rsqrt(var + LN_EPS) * g_ref[...] + bt_ref[...]

    if res_idx is not None:
        y = y + res_val

    o_ref[...] = y.astype(o_ref.dtype)


def mlp_block(feats, w1_list, b1, extra_layers, w_out, b_out, *,
              gamma=None, beta=None, res_idx=None, ln_valid=None,
              row_tile=ROW_TILE, alias_res_to_out=False):
    """One fused pallas_call for a whole MLP block, row-tiled ('parallel')."""
    assert len(feats) == len(w1_list)
    M = feats[0].shape[0]
    d_out = w_out.shape[1]
    TM = M if M <= row_tile else row_tile
    grid = (pl.cdiv(M, TM),)

    def row_spec(width):
        return pl.BlockSpec((TM, width), lambda i: (i, 0))

    def full_spec(a):
        return pl.BlockSpec(a.shape, lambda i: (0, 0))

    args, specs = [], []
    for f in feats:
        args.append(f); specs.append(row_spec(f.shape[1]))
    for w in w1_list:
        args.append(w); specs.append(full_spec(w))
    b1 = b1.reshape(1, -1)
    args.append(b1); specs.append(full_spec(b1))
    for (w, b) in extra_layers:
        b = b.reshape(1, -1)
        args.append(w); specs.append(full_spec(w))
        args.append(b); specs.append(full_spec(b))
    args.append(w_out); specs.append(full_spec(w_out))
    b_out = b_out.reshape(1, -1)
    args.append(b_out); specs.append(full_spec(b_out))
    has_ln = gamma is not None
    if has_ln:
        gamma = gamma.reshape(1, -1); beta = beta.reshape(1, -1)
        args.append(gamma); specs.append(full_spec(gamma))
        args.append(beta); specs.append(full_spec(beta))

    io_aliases = {}
    if alias_res_to_out and res_idx is not None:
        r = feats[res_idx]
        if r.shape == (M, d_out) and r.dtype == jnp.float32:
            io_aliases = {res_idx: 0}      # update the state buffer in place

    kernel = functools.partial(
        _mlp_block_kernel, n_feat=len(feats), n_extra=len(extra_layers),
        has_ln=has_ln, res_idx=res_idx,
        ln_valid=d_out if ln_valid is None else int(ln_valid))

    return pl.pallas_call(
        kernel,
        out_shape=jax.ShapeDtypeStruct((M, d_out), jnp.float32),
        grid=grid,
        in_specs=specs,
        out_specs=pl.BlockSpec((TM, d_out), lambda i: (i, 0)),
        input_output_aliases=io_aliases,
        compiler_params=pltpu.CompilerParams(
            dimension_semantics=("parallel",),
            vmem_limit_bytes=_vmem_limit_bytes()),
    )(*args)


# ----------------------------------------------------------------------------
# Parameter construction (deterministic, mirrors the PyTorch __init__ shapes)
# ----------------------------------------------------------------------------
def _dense(key, fan_in, fan_out):
    k1, k2 = jax.random.split(key)
    w = jax.random.normal(k1, (fan_in, fan_out), jnp.float32) / jnp.sqrt(float(fan_in))
    b = jax.random.normal(k2, (fan_out,), jnp.float32) * 0.01
    return w, b


def _mlp_ln_encoder(key, in_dim, hidden, latent, num_layers):
    keys = jax.random.split(key, num_layers + 2)
    hidden_layers = []
    d = in_dim
    for li in range(num_layers):
        hidden_layers.append(_dense(keys[li], d, hidden))
        d = hidden
    w_out, b_out = _dense(keys[num_layers], hidden, latent)
    gamma = 1.0 + 0.05 * jax.random.normal(keys[num_layers + 1], (latent,), jnp.float32)
    beta = jnp.zeros((latent,), jnp.float32)
    return {"hidden": hidden_layers, "w_out": w_out, "b_out": b_out,
            "gamma": gamma, "beta": beta}


def _processor_params(key, latent):
    keys = jax.random.split(key, 6)
    we1, be1 = _dense(keys[0], 3 * latent, latent)
    we2, be2 = _dense(keys[1], latent, latent)
    wn1, bn1 = _dense(keys[2], 2 * latent, latent)
    wn2, bn2 = _dense(keys[3], latent, latent)
    ge = 1.0 + 0.05 * jax.random.normal(keys[4], (latent,), jnp.float32)
    gn = 1.0 + 0.05 * jax.random.normal(keys[5], (latent,), jnp.float32)
    return {"we1": we1, "be1": be1, "we2": we2, "be2": be2,
            "ge": ge, "bte": jnp.zeros((latent,), jnp.float32),
            "wn1": wn1, "bn1": bn1, "wn2": wn2, "bn2": bn2,
            "gn": gn, "btn": jnp.zeros((latent,), jnp.float32)}


def _decoder_params(key, latent, hidden, out_dim, num_layers):
    keys = jax.random.split(key, num_layers + 1)
    layers = []
    d = latent
    for li in range(num_layers):
        layers.append(_dense(keys[li], d, hidden))
        d = hidden
    w_out, b_out = _dense(keys[num_layers], hidden, out_dim)
    return {"hidden": layers, "w_out": w_out, "b_out": b_out}


def init_base_gnn_params(key, cfg):
    k_ne, k_ee, k_p, k_d = jax.random.split(key, 4)
    params = {
        "node_encoder": _mlp_ln_encoder(k_ne, cfg["input_dim_node"], cfg["hidden_dim"],
                                        cfg["latent_dim"], cfg["node_encoder_layers"]),
        "edge_encoder": _mlp_ln_encoder(k_ee, cfg["input_dim_edge"], cfg["hidden_dim"],
                                        cfg["latent_dim"], cfg["edge_encoder_layers"]),
        "decoder": _decoder_params(k_d, cfg["latent_dim"], cfg["hidden_dim"],
                                   cfg["output_dim"], cfg["node_decoder_layers"]),
    }
    if cfg["shared_processor"]:
        params["processor"] = [_processor_params(k_p, cfg["latent_dim"])]
    else:
        pk = jax.random.split(k_p, cfg["num_messages"])
        params["processor"] = [_processor_params(pk[i], cfg["latent_dim"])
                               for i in range(cfg["num_messages"])]
    return params


# ----------------------------------------------------------------------------
# Forward pass == BaseGNN.one_step
# ----------------------------------------------------------------------------
def base_gnn_forward(params, cfg, node_attr, edge_index, edge_attr,
                     num_messages=0, decoding=True):
    if num_messages == 0:
        num_messages = cfg["num_messages"]
    n_nodes = node_attr.shape[0]
    D = cfg["latent_dim"]
    Dp = _round_up(max(D, LANE), LANE)            # lane-dense latent width

    b16 = lambda w: w.astype(jnp.bfloat16)        # pre-cast weights (wrapper-side)

    # --- encoders: one fused pallas_call each, latent padded to Dp lanes -----
    def run_encoder(enc, x):
        (w0, b0), rest = enc["hidden"][0], enc["hidden"][1:]
        return mlp_block(
            [x], [b16(w0)], b0, [(b16(w), b) for (w, b) in rest],
            b16(_pad_last(enc["w_out"], Dp)), _pad_last(enc["b_out"], Dp),
            gamma=_pad_last(enc["gamma"], Dp), beta=_pad_last(enc["beta"], Dp),
            ln_valid=D)

    latent = run_encoder(params["node_encoder"], node_attr)   # (N, Dp), pad lanes 0
    e_lat = run_encoder(params["edge_encoder"], edge_attr)     # (E, Dp), pad lanes 0

    # --- processor ------------------------------------------------------------
    src = edge_index[0].astype(jnp.int32)
    dst = edge_index[1].astype(jnp.int32)

    def prep_proc(p):
        we1, wn1 = p["we1"], p["wn1"]
        return dict(
            w_i=b16(_pad_first(we1[:D], Dp)),          # consumes padded x_i
            w_j=b16(_pad_first(we1[D:2 * D], Dp)),     # consumes padded x_j
            w_e=b16(_pad_first(we1[2 * D:], Dp)),      # consumes padded e
            be1=p["be1"],
            we2=b16(_pad_last(p["we2"], Dp)), be2=_pad_last(p["be2"], Dp),
            ge=_pad_last(p["ge"], Dp), bte=_pad_last(p["bte"], Dp),
            w_x=b16(_pad_first(wn1[:D], Dp)),
            w_a=b16(_pad_first(wn1[D:], Dp)),
            bn1=p["bn1"],
            wn2=b16(_pad_last(p["wn2"], Dp)), bn2=_pad_last(p["bn2"], Dp),
            gn=_pad_last(p["gn"], Dp), btn=_pad_last(p["btn"], Dp))

    procs = [prep_proc(p) for p in params["processor"]]

    for s in range(num_messages):
        p = procs[0] if cfg["shared_processor"] else procs[s]

        # gather node states at edge endpoints (XLA gather, O(E*Dp))
        x_j = jnp.take(latent, src, axis=0)      # source nodes  (edge_index[0])
        x_i = jnp.take(latent, dst, axis=0)      # target nodes  (edge_index[1])

        # edge update: e <- LN(MLP([x_i, x_j, e])) + e  (fused, in-place output)
        e_lat = mlp_block(
            [x_i, x_j, e_lat], [p["w_i"], p["w_j"], p["w_e"]], p["be1"],
            [], p["we2"], p["be2"], gamma=p["ge"], beta=p["bte"],
            res_idx=2, ln_valid=D, alias_res_to_out=True)

        # scatter-add updated edge messages back to nodes (XLA scatter-add)
        # TODO(synk): aggregation at edge_index[0] follows the standard
        # MeshGraphNets ProcessorLayer; switch `src` -> `dst` if the reference
        # layer aggregates at edge_index[1].
        aggr = jax.ops.segment_sum(e_lat, src, num_segments=n_nodes)

        # node update: x <- x + LN(MLP([x, aggr]))  (fused, in-place output)
        latent = mlp_block(
            [latent, aggr], [p["w_x"], p["w_a"]], p["bn1"],
            [], p["wn2"], p["bn2"], gamma=p["gn"], beta=p["btn"],
            res_idx=0, ln_valid=D, alias_res_to_out=True)

    if not decoding:
        return latent[:, :D]

    # --- decoder (lane-dense padded output, sliced outside the kernel) -------
    dec = params["decoder"]
    (w0, b0), rest = dec["hidden"][0], dec["hidden"][1:]
    out_dim = dec["w_out"].shape[1]
    out_p = _round_up(max(out_dim, LANE), LANE)
    out = mlp_block(
        [latent], [b16(_pad_first(w0, Dp))], b0,
        [(b16(w), b) for (w, b) in rest],
        b16(_pad_last(dec["w_out"], out_p)), _pad_last(dec["b_out"], out_p))
    return out[:, :out_dim]


# ----------------------------------------------------------------------------
if __name__ == "__main__":
    cfg = dict(
        input_dim_node=12,
        input_dim_edge=7,
        hidden_dim=32,
        latent_dim=32,
        output_dim=3,
        num_messages=2,
        node_encoder_layers=1,
        edge_encoder_layers=1,
        node_decoder_layers=1,
        shared_processor=False,
    )
    N_NODES, N_EDGES = 16, 40

    key = jax.random.PRNGKey(0)
    k_params, k_x, k_e, k_idx = jax.random.split(key, 4)

    params = init_base_gnn_params(k_params, cfg)
    node_attr = jax.random.normal(k_x, (N_NODES, cfg["input_dim_node"]), jnp.float32)
    edge_attr = jax.random.normal(k_e, (N_EDGES, cfg["input_dim_edge"]), jnp.float32)
    edge_index = jax.random.randint(k_idx, (2, N_EDGES), 0, N_NODES, dtype=jnp.int32)

    fwd = jax.jit(lambda p, na, ei, ea: base_gnn_forward(p, cfg, na, ei, ea))
    out = fwd(params, node_attr, edge_index, edge_attr)
    out = jax.block_until_ready(out)

    assert out.shape == (N_NODES, cfg["output_dim"])
    assert bool(jnp.all(jnp.isfinite(out)))
    print("KERNEL_OK")
</pallas_src>

<mosaic_0001>
module attributes {stable_mosaic.version = 11 : i64} {
  func.func @_mlp_block_kernel(%arg0: i32, %arg1: memref<16x12xf32, #tpu.memory_space<vmem>>, %arg2: memref<12x32xbf16, #tpu.memory_space<vmem>>, %arg3: memref<1x32xf32, #tpu.memory_space<vmem>>, %arg4: memref<32x128xbf16, #tpu.memory_space<vmem>>, %arg5: memref<1x128xf32, #tpu.memory_space<vmem>>, %arg6: memref<1x128xf32, #tpu.memory_space<vmem>>, %arg7: memref<1x128xf32, #tpu.memory_space<vmem>>, %arg8: memref<16x128xf32, #tpu.memory_space<vmem>>) attributes {dimension_semantics = [#tpu.dimension_semantics<parallel>], iteration_bounds = array<i64: 1>, scalar_prefetch = 0 : i64, scratch_operands = 0 : i64, tpu.core_type = #tpu.core_type<tc>, window_params = [{transform_indices = @transform_0, window_bounds = array<i64: 16, 12>}, {pipeline_mode = #tpu.pipeline_mode<synchronous>, transform_indices = @transform_1, window_bounds = array<i64: 12, 32>}, {pipeline_mode = #tpu.pipeline_mode<synchronous>, transform_indices = @transform_2, window_bounds = array<i64: 1, 32>}, {pipeline_mode = #tpu.pipeline_mode<synchronous>, transform_indices = @transform_3, window_bounds = array<i64: 32, 128>}, {pipeline_mode = #tpu.pipeline_mode<synchronous>, transform_indices = @transform_4, window_bounds = array<i64: 1, 128>}, {pipeline_mode = #tpu.pipeline_mode<synchronous>, transform_indices = @transform_5, window_bounds = array<i64: 1, 128>}, {pipeline_mode = #tpu.pipeline_mode<synchronous>, transform_indices = @transform_6, window_bounds = array<i64: 1, 128>}, {transform_indices = @transform_7, window_bounds = array<i64: 16, 128>}]} {
    %c0 = arith.constant 0 : index
    %c0_0 = arith.constant 0 : index
    %0 = vector.load %arg1[%c0, %c0_0] : memref<16x12xf32, #tpu.memory_space<vmem>>, vector<16x12xf32>
    %1 = arith.truncf %0 : vector<16x12xf32> to vector<16x12xbf16>
    %c0_1 = arith.constant 0 : index
    %c0_2 = arith.constant 0 : index
    %2 = vector.load %arg2[%c0_1, %c0_2] : memref<12x32xbf16, #tpu.memory_space<vmem>>, vector<12x32xbf16>
    %cst = arith.constant dense<0.000000e+00> : vector<16x32xf32>
    %3 = tpu.matmul %1, %2, %cst {dimension_numbers = #tpu.dot_dimension_numbers<[1], [0], [0], [1], [0, 0, 1, 1], [], []>} : vector<16x12xbf16>, vector<12x32xbf16>, vector<16x32xf32> -> vector<16x32xf32>
    %c0_3 = arith.constant 0 : index
    %c0_4 = arith.constant 0 : index
    %4 = vector.load %arg3[%c0_3, %c0_4] : memref<1x32xf32, #tpu.memory_space<vmem>>, vector<1x32xf32>
    %5 = vector.broadcast %4 : vector<1x32xf32> to vector<16x32xf32>
    %6 = arith.addf %3, %5 : vector<16x32xf32>
    %cst_5 = arith.constant 0.000000e+00 : f32
    %7 = vector.broadcast %cst_5 : f32 to vector<16x32xf32>
    %8 = arith.maximumf %6, %7 : vector<16x32xf32>
    %9 = arith.truncf %8 : vector<16x32xf32> to vector<16x32xbf16>
    %c0_6 = arith.constant 0 : index
    %c0_7 = arith.constant 0 : index
    %10 = vector.load %arg4[%c0_6, %c0_7] : memref<32x128xbf16, #tpu.memory_space<vmem>>, vector<32x128xbf16>
    %cst_8 = arith.constant dense<0.000000e+00> : vector<16x128xf32>
    %11 = tpu.matmul %9, %10, %cst_8 {dimension_numbers = #tpu.dot_dimension_numbers<[1], [0], [0], [1], [0, 0, 1, 1], [], []>} : vector<16x32xbf16>, vector<32x128xbf16>, vector<16x128xf32> -> vector<16x128xf32>
    %c0_9 = arith.constant 0 : index
    %c0_10 = arith.constant 0 : index
    %12 = vector.load %arg5[%c0_9, %c0_10] : memref<1x128xf32, #tpu.memory_space<vmem>>, vector<1x128xf32>
    %13 = vector.broadcast %12 : vector<1x128xf32> to vector<16x128xf32>
    %14 = arith.addf %11, %13 : vector<16x128xf32>
    %15 = tpu.iota {dimensions = array<i32: 1>} : vector<1x128xi32>
    %c32_i32 = arith.constant 32 : i32
    %16 = vector.broadcast %c32_i32 : i32 to vector<1x128xi32>
    %17 = arith.cmpi slt, %15, %16 : vector<1x128xi32>
    %18 = arith.extui %17 : vector<1x128xi1> to vector<1x128xi32>
    %19 = arith.sitofp %18 : vector<1x128xi32> to vector<1x128xf32>
    %20 = vector.broadcast %19 : vector<1x128xf32> to vector<16x128xf32>
    %21 = arith.mulf %14, %20 : vector<16x128xf32>
    %cst_11 = arith.constant dense<0.000000e+00> : vector<16xf32>
    %22 = vector.multi_reduction <add>, %21, %cst_11 [1] : vector<16x128xf32> to vector<16xf32>
    %23 = vector.shape_cast %22 : vector<16xf32> to vector<16x1xf32>
    %cst_12 = arith.constant 3.125000e-02 : f32
    %24 = vector.broadcast %cst_12 : f32 to vector<16x1xf32>
    %25 = arith.mulf %23, %24 : vector<16x1xf32>
    %26 = vector.broadcast %25 : vector<16x1xf32> to vector<16x128xf32>
    %27 = arith.subf %14, %26 : vector<16x128xf32>
    %28 = vector.broadcast %19 : vector<1x128xf32> to vector<16x128xf32>
    %29 = arith.mulf %27, %28 : vector<16x128xf32>
    %30 = arith.mulf %29, %29 : vector<16x128xf32>
    %cst_13 = arith.constant dense<0.000000e+00> : vector<16xf32>
    %31 = vector.multi_reduction <add>, %30, %cst_13 [1] : vector<16x128xf32> to vector<16xf32>
    %32 = vector.shape_cast %31 : vector<16xf32> to vector<16x1xf32>
    %cst_14 = arith.constant 3.125000e-02 : f32
    %33 = vector.broadcast %cst_14 : f32 to vector<16x1xf32>
    %34 = arith.mulf %32, %33 : vector<16x1xf32>
    %cst_15 = arith.constant 9.99999974E-6 : f32
    %35 = vector.broadcast %cst_15 : f32 to vector<16x1xf32>
    %36 = arith.addf %34, %35 : vector<16x1xf32>
    %37 = math.rsqrt %36 : vector<16x1xf32>
    %38 = vector.broadcast %37 : vector<16x1xf32> to vector<16x128xf32>
    %39 = arith.mulf %29, %38 : vector<16x128xf32>
    %c0_16 = arith.constant 0 : index
    %c0_17 = arith.constant 0 : index
    %40 = vector.load %arg6[%c0_16, %c0_17] : memref<1x128xf32, #tpu.memory_space<vmem>>, vector<1x128xf32>
    %41 = vector.broadcast %40 : vector<1x128xf32> to vector<16x128xf32>
    %42 = arith.mulf %39, %41 : vector<16x128xf32>
    %c0_18 = arith.constant 0 : index
    %c0_19 = arith.constant 0 : index
    %43 = vector.load %arg7[%c0_18, %c0_19] : memref<1x128xf32, #tpu.memory_space<vmem>>, vector<1x128xf32>
    %44 = vector.broadcast %43 : vector<1x128xf32> to vector<16x128xf32>
    %45 = arith.addf %42, %44 : vector<16x128xf32>
    %c0_20 = arith.constant 0 : index
    %c0_21 = arith.constant 0 : index
    %46 = vector.load %arg8[%c0_20, %c0_21] : memref<16x128xf32, #tpu.memory_space<vmem>>, vector<16x128xf32>
    tpu.vector_store %arg8[%c0_20, %c0_21], %45 {strides = array<i32>} : memref<16x128xf32, #tpu.memory_space<vmem>>, vector<16x128xf32>,
    return
  }
  func.func @transform_0(%arg0: i32) -> (i32, i32) {
    %c0_i32 = arith.constant 0 : i32
    %c0_i32_0 = arith.constant 0 : i32
    return %arg0, %c0_i32 : i32, i32
  }
  func.func @transform_1(%arg0: i32) -> (i32, i32) {
    %c0_i32 = arith.constant 0 : i32
    %c0_i32_0 = arith.constant 0 : i32
    %c0_i32_1 = arith.constant 0 : i32
    return %c0_i32, %c0_i32_0 : i32, i32
  }
  func.func @transform_2(%arg0: i32) -> (i32, i32) {
    %c0_i32 = arith.constant 0 : i32
    %c0_i32_0 = arith.constant 0 : i32
    %c0_i32_1 = arith.constant 0 : i32
    return %c0_i32, %c0_i32_0 : i32, i32
  }
  func.func @transform_3(%arg0: i32) -> (i32, i32) {
    %c0_i32 = arith.constant 0 : i32
    %c0_i32_0 = arith.constant 0 : i32
    %c0_i32_1 = arith.constant 0 : i32
    return %c0_i32, %c0_i32_0 : i32, i32
  }
  func.func @transform_4(%arg0: i32) -> (i32, i32) {
    %c0_i32 = arith.constant 0 : i32
    %c0_i32_0 = arith.constant 0 : i32
    %c0_i32_1 = arith.constant 0 : i32
    return %c0_i32, %c0_i32_0 : i32, i32
  }
  func.func @transform_5(%arg0: i32) -> (i32, i32) {
    %c0_i32 = arith.constant 0 : i32
    %c0_i32_0 = arith.constant 0 : i32
    %c0_i32_1 = arith.constant 0 : i32
    return %c0_i32, %c0_i32_0 : i32, i32
  }
  func.func @transform_6(%arg0: i32) -> (i32, i32) {
    %c0_i32 = arith.constant 0 : i32
    %c0_i32_0 = arith.constant 0 : i32
    %c0_i32_1 = arith.constant 0 : i32
    return %c0_i32, %c0_i32_0 : i32, i32
  }
  func.func @transform_7(%arg0: i32) -> (i32, i32) {
    %c0_i32 = arith.constant 0 : i32
    %c0_i32_0 = arith.constant 0 : i32
    return %arg0, %c0_i32 : i32, i32
  }
}

module attributes {stable_mosaic.version = 11 : i64} {
  func.func @_mlp_block_kernel(%arg0: i32, %arg1: memref<40x7xf32, #tpu.memory_space<vmem>>, %arg2: memref<7x32xbf16, #tpu.memory_space<vmem>>, %arg3: memref<1x32xf32, #tpu.memory_space<vmem>>, %arg4: memref<32x128xbf16, #tpu.memory_space<vmem>>, %arg5: memref<1x128xf32, #tpu.memory_space<vmem>>, %arg6: memref<1x128xf32, #tpu.memory_space<vmem>>, %arg7: memref<1x128xf32, #tpu.memory_space<vmem>>, %arg8: memref<40x128xf32, #tpu.memory_space<vmem>>) attributes {dimension_semantics = [#tpu.dimension_semantics<parallel>], iteration_bounds = array<i64: 1>, scalar_prefetch = 0 : i64, scratch_operands = 0 : i64, tpu.core_type = #tpu.core_type<tc>, window_params = [{transform_indices = @transform_0, window_bounds = array<i64: 40, 7>}, {pipeline_mode = #tpu.pipeline_mode<synchronous>, transform_indices = @transform_1, window_bounds = array<i64: 7, 32>}, {pipeline_mode = #tpu.pipeline_mode<synchronous>, transform_indices = @transform_2, window_bounds = array<i64: 1, 32>}, {pipeline_mode = #tpu.pipeline_mode<synchronous>, transform_indices = @transform_3, window_bounds = array<i64: 32, 128>}, {pipeline_mode = #tpu.pipeline_mode<synchronous>, transform_indices = @transform_4, window_bounds = array<i64: 1, 128>}, {pipeline_mode = #tpu.pipeline_mode<synchronous>, transform_indices = @transform_5, window_bounds = array<i64: 1, 128>}, {pipeline_mode = #tpu.pipeline_mode<synchronous>, transform_indices = @transform_6, window_bounds = array<i64: 1, 128>}, {transform_indices = @transform_7, window_bounds = array<i64: 40, 128>}]} {
    %c0 = arith.constant 0 : index
    %c0_0 = arith.constant 0 : index
    %0 = vector.load %arg1[%c0, %c0_0] : memref<40x7xf32, #tpu.memory_space<vmem>>, vector<40x7xf32>
    %1 = arith.truncf %0 : vector<40x7xf32> to vector<40x7xbf16>
    %c0_1 = arith.constant 0 : index
    %c0_2 = arith.constant 0 : index
    %2 = vector.load %arg2[%c0_1, %c0_2] : memref<7x32xbf16, #tpu.memory_space<vmem>>, vector<7x32xbf16>
    %cst = arith.constant dense<0.000000e+00> : vector<40x32xf32>
    %3 = tpu.matmul %1, %2, %cst {dimension_numbers = #tpu.dot_dimension_numbers<[1], [0], [0], [1], [0, 0, 1, 1], [], []>} : vector<40x7xbf16>, vector<7x32xbf16>, vector<40x32xf32> -> vector<40x32xf32>
    %c0_3 = arith.constant 0 : index
    %c0_4 = arith.constant 0 : index
    %4 = vector.load %arg3[%c0_3, %c0_4] : memref<1x32xf32, #tpu.memory_space<vmem>>, vector<1x32xf32>
    %5 = vector.broadcast %4 : vector<1x32xf32> to vector<40x32xf32>
    %6 = arith.addf %3, %5 : vector<40x32xf32>
    %cst_5 = arith.constant 0.000000e+00 : f32
    %7 = vector.broadcast %cst_5 : f32 to vector<40x32xf32>
    %8 = arith.maximumf %6, %7 : vector<40x32xf32>
    %9 = arith.truncf %8 : vector<40x32xf32> to vector<40x32xbf16>
    %c0_6 = arith.constant 0 : index
    %c0_7 = arith.constant 0 : index
    %10 = vector.load %arg4[%c0_6, %c0_7] : memref<32x128xbf16, #tpu.memory_space<vmem>>, vector<32x128xbf16>
    %cst_8 = arith.constant dense<0.000000e+00> : vector<40x128xf32>
    %11 = tpu.matmul %9, %10, %cst_8 {dimension_numbers = #tpu.dot_dimension_numbers<[1], [0], [0], [1], [0, 0, 1, 1], [], []>} : vector<40x32xbf16>, vector<32x128xbf16>, vector<40x128xf32> -> vector<40x128xf32>
    %c0_9 = arith.constant 0 : index
    %c0_10 = arith.constant 0 : index
    %12 = vector.load %arg5[%c0_9, %c0_10] : memref<1x128xf32, #tpu.memory_space<vmem>>, vector<1x128xf32>
    %13 = vector.broadcast %12 : vector<1x128xf32> to vector<40x128xf32>
    %14 = arith.addf %11, %13 : vector<40x128xf32>
    %15 = tpu.iota {dimensions = array<i32: 1>} : vector<1x128xi32>
    %c32_i32 = arith.constant 32 : i32
    %16 = vector.broadcast %c32_i32 : i32 to vector<1x128xi32>
    %17 = arith.cmpi slt, %15, %16 : vector<1x128xi32>
    %18 = arith.extui %17 : vector<1x128xi1> to vector<1x128xi32>
    %19 = arith.sitofp %18 : vector<1x128xi32> to vector<1x128xf32>
    %20 = vector.broadcast %19 : vector<1x128xf32> to vector<40x128xf32>
    %21 = arith.mulf %14, %20 : vector<40x128xf32>
    %cst_11 = arith.constant dense<0.000000e+00> : vector<40xf32>
    %22 = vector.multi_reduction <add>, %21, %cst_11 [1] : vector<40x128xf32> to vector<40xf32>
    %23 = vector.shape_cast %22 : vector<40xf32> to vector<40x1xf32>
    %cst_12 = arith.constant 3.125000e-02 : f32
    %24 = vector.broadcast %cst_12 : f32 to vector<40x1xf32>
    %25 = arith.mulf %23, %24 : vector<40x1xf32>
    %26 = vector.broadcast %25 : vector<40x1xf32> to vector<40x128xf32>
    %27 = arith.subf %14, %26 : vector<40x128xf32>
    %28 = vector.broadcast %19 : vector<1x128xf32> to vector<40x128xf32>
    %29 = arith.mulf %27, %28 : vector<40x128xf32>
    %30 = arith.mulf %29, %29 : vector<40x128xf32>
    %cst_13 = arith.constant dense<0.000000e+00> : vector<40xf32>
    %31 = vector.multi_reduction <add>, %30, %cst_13 [1] : vector<40x128xf32> to vector<40xf32>
    %32 = vector.shape_cast %31 : vector<40xf32> to vector<40x1xf32>
    %cst_14 = arith.constant 3.125000e-02 : f32
    %33 = vector.broadcast %cst_14 : f32 to vector<40x1xf32>
    %34 = arith.mulf %32, %33 : vector<40x1xf32>
    %cst_15 = arith.constant 9.99999974E-6 : f32
    %35 = vector.broadcast %cst_15 : f32 to vector<40x1xf32>
    %36 = arith.addf %34, %35 : vector<40x1xf32>
    %37 = math.rsqrt %36 : vector<40x1xf32>
    %38 = vector.broadcast %37 : vector<40x1xf32> to vector<40x128xf32>
    %39 = arith.mulf %29, %38 : vector<40x128xf32>
    %c0_16 = arith.constant 0 : index
    %c0_17 = arith.constant 0 : index
    %40 = vector.load %arg6[%c0_16, %c0_17] : memref<1x128xf32, #tpu.memory_space<vmem>>, vector<1x128xf32>
    %41 = vector.broadcast %40 : vector<1x128xf32> to vector<40x128xf32>
    %42 = arith.mulf %39, %41 : vector<40x128xf32>
    %c0_18 = arith.constant 0 : index
    %c0_19 = arith.constant 0 : index
    %43 = vector.load %arg7[%c0_18, %c0_19] : memref<1x128xf32, #tpu.memory_space<vmem>>, vector<1x128xf32>
    %44 = vector.broadcast %43 : vector<1x128xf32> to vector<40x128xf32>
    %45 = arith.addf %42, %44 : vector<40x128xf32>
    %c0_20 = arith.constant 0 : index
    %c0_21 = arith.constant 0 : index
    %46 = vector.load %arg8[%c0_20, %c0_21] : memref<40x128xf32, #tpu.memory_space<vmem>>, vector<40x128xf32>
    tpu.vector_store %arg8[%c0_20, %c0_21], %45 {strides = array<i32>} : memref<40x128xf32, #tpu.memory_space<vmem>>, vector<40x128xf32>,
    return
  }
  func.func @transform_0(%arg0: i32) -> (i32, i32) {
    %c0_i32 = arith.constant 0 : i32
    %c0_i32_0 = arith.constant 0 : i32
    return %arg0, %c0_i32 : i32, i32
  }
  func.func @transform_1(%arg0: i32) -> (i32, i32) {
    %c0_i32 = arith.constant 0 : i32
    %c0_i32_0 = arith.constant 0 : i32
    %c0_i32_1 = arith.constant 0 : i32
    return %c0_i32, %c0_i32_0 : i32, i32
  }
  func.func @transform_2(%arg0: i32) -> (i32, i32) {
    %c0_i32 = arith.constant 0 : i32
    %c0_i32_0 = arith.constant 0 : i32
    %c0_i32_1 = arith.constant 0 : i32
    return %c0_i32, %c0_i32_0 : i32, i32
  }
  func.func @transform_3(%arg0: i32) -> (i32, i32) {
    %c0_i32 = arith.constant 0 : i32
    %c0_i32_0 = arith.constant 0 : i32
    %c0_i32_1 = arith.constant 0 : i32
    return %c0_i32, %c0_i32_0 : i32, i32
  }
  func.func @transform_4(%arg0: i32) -> (i32, i32) {
    %c0_i32 = arith.constant 0 : i32
    %c0_i32_0 = arith.constant 0 : i32
    %c0_i32_1 = arith.constant 0 : i32
    return %c0_i32, %c0_i32_0 : i32, i32
  }
  func.func @transform_5(%arg0: i32) -> (i32, i32) {
    %c0_i32 = arith.constant 0 : i32
    %c0_i32_0 = arith.constant 0 : i32
    %c0_i32_1 = arith.constant 0 : i32
    return %c0_i32, %c0_i32_0 : i32, i32
  }
  func.func @transform_6(%arg0: i32) -> (i32, i32) {
    %c0_i32 = arith.constant 0 : i32
    %c0_i32_0 = arith.constant 0 : i32
    %c0_i32_1 = arith.constant 0 : i32
    return %c0_i32, %c0_i32_0 : i32, i32
  }
  func.func @transform_7(%arg0: i32) -> (i32, i32) {
    %c0_i32 = arith.constant 0 : i32
    %c0_i32_0 = arith.constant 0 : i32
    return %arg0, %c0_i32 : i32, i32
  }
}

module attributes {stable_mosaic.version = 11 : i64} {
  func.func @_mlp_block_kernel(%arg0: i32, %arg1: memref<40x128xf32, #tpu.memory_space<vmem>>, %arg2: memref<40x128xf32, #tpu.memory_space<vmem>>, %arg3: memref<40x128xf32, #tpu.memory_space<vmem>>, %arg4: memref<128x32xbf16, #tpu.memory_space<vmem>>, %arg5: memref<128x32xbf16, #tpu.memory_space<vmem>>, %arg6: memref<128x32xbf16, #tpu.memory_space<vmem>>, %arg7: memref<1x32xf32, #tpu.memory_space<vmem>>, %arg8: memref<32x128xbf16, #tpu.memory_space<vmem>>, %arg9: memref<1x128xf32, #tpu.memory_space<vmem>>, %arg10: memref<1x128xf32, #tpu.memory_space<vmem>>, %arg11: memref<1x128xf32, #tpu.memory_space<vmem>>, %arg12: memref<40x128xf32, #tpu.memory_space<vmem>>) attributes {dimension_semantics = [#tpu.dimension_semantics<parallel>], iteration_bounds = array<i64: 1>, scalar_prefetch = 0 : i64, scratch_operands = 0 : i64, tpu.core_type = #tpu.core_type<tc>, window_params = [{transform_indices = @transform_0, window_bounds = array<i64: 40, 128>}, {transform_indices = @transform_1, window_bounds = array<i64: 40, 128>}, {transform_indices = @transform_2, window_bounds = array<i64: 40, 128>}, {pipeline_mode = #tpu.pipeline_mode<synchronous>, transform_indices = @transform_3, window_bounds = array<i64: 128, 32>}, {pipeline_mode = #tpu.pipeline_mode<synchronous>, transform_indices = @transform_4, window_bounds = array<i64: 128, 32>}, {pipeline_mode = #tpu.pipeline_mode<synchronous>, transform_indices = @transform_5, window_bounds = array<i64: 128, 32>}, {pipeline_mode = #tpu.pipeline_mode<synchronous>, transform_indices = @transform_6, window_bounds = array<i64: 1, 32>}, {pipeline_mode = #tpu.pipeline_mode<synchronous>, transform_indices = @transform_7, window_bounds = array<i64: 32, 128>}, {pipeline_mode = #tpu.pipeline_mode<synchronous>, transform_indices = @transform_8, window_bounds = array<i64: 1, 128>}, {pipeline_mode = #tpu.pipeline_mode<synchronous>, transform_indices = @transform_9, window_bounds = array<i64: 1, 128>}, {pipeline_mode = #tpu.pipeline_mode<synchronous>, transform_indices = @transform_10, window_bounds = array<i64: 1, 128>}, {transform_indices = @transform_11, window_bounds = array<i64: 40, 128>}]} {
    %c0 = arith.constant 0 : index
    %c0_0 = arith.constant 0 : index
    %0 = vector.load %arg1[%c0, %c0_0] : memref<40x128xf32, #tpu.memory_space<vmem>>, vector<40x128xf32>
    %1 = arith.truncf %0 : vector<40x128xf32> to vector<40x128xbf16>
    %c0_1 = arith.constant 0 : index
    %c0_2 = arith.constant 0 : index
    %2 = vector.load %arg4[%c0_1, %c0_2] : memref<128x32xbf16, #tpu.memory_space<vmem>>, vector<128x32xbf16>
    %cst = arith.constant dense<0.000000e+00> : vector<40x32xf32>
    %3 = tpu.matmul %1, %2, %cst {dimension_numbers = #tpu.dot_dimension_numbers<[1], [0], [0], [1], [0, 0, 1, 1], [], []>} : vector<40x128xbf16>, vector<128x32xbf16>, vector<40x32xf32> -> vector<40x32xf32>
    %c0_3 = arith.constant 0 : index
    %c0_4 = arith.constant 0 : index
    %4 = vector.load %arg2[%c0_3, %c0_4] : memref<40x128xf32, #tpu.memory_space<vmem>>, vector<40x128xf32>
    %5 = arith.truncf %4 : vector<40x128xf32> to vector<40x128xbf16>
    %c0_5 = arith.constant 0 : index
    %c0_6 = arith.constant 0 : index
    %6 = vector.load %arg5[%c0_5, %c0_6] : memref<128x32xbf16, #tpu.memory_space<vmem>>, vector<128x32xbf16>
    %cst_7 = arith.constant dense<0.000000e+00> : vector<40x32xf32>
    %7 = tpu.matmul %5, %6, %cst_7 {dimension_numbers = #tpu.dot_dimension_numbers<[1], [0], [0], [1], [0, 0, 1, 1], [], []>} : vector<40x128xbf16>, vector<128x32xbf16>, vector<40x32xf32> -> vector<40x32xf32>
    %8 = arith.addf %3, %7 : vector<40x32xf32>
    %c0_8 = arith.constant 0 : index
    %c0_9 = arith.constant 0 : index
    %9 = vector.load %arg3[%c0_8, %c0_9] : memref<40x128xf32, #tpu.memory_space<vmem>>, vector<40x128xf32>
    %10 = arith.truncf %9 : vector<40x128xf32> to vector<40x128xbf16>
    %c0_10 = arith.constant 0 : index
    %c0_11 = arith.constant 0 : index
    %11 = vector.load %arg6[%c0_10, %c0_11] : memref<128x32xbf16, #tpu.memory_space<vmem>>, vector<128x32xbf16>
    %cst_12 = arith.constant dense<0.000000e+00> : vector<40x32xf32>
    %12 = tpu.matmul %10, %11, %cst_12 {dimension_numbers = #tpu.dot_dimension_numbers<[1], [0], [0], [1], [0, 0, 1, 1], [], []>} : vector<40x128xbf16>, vector<128x32xbf16>, vector<40x32xf32> -> vector<40x32xf32>
    %13 = arith.addf %8, %12 : vector<40x32xf32>
    %c0_13 = arith.constant 0 : index
    %c0_14 = arith.constant 0 : index
    %14 = vector.load %arg7[%c0_13, %c0_14] : memref<1x32xf32, #tpu.memory_space<vmem>>, vector<1x32xf32>
    %15 = vector.broadcast %14 : vector<1x32xf32> to vector<40x32xf32>
    %16 = arith.addf %13, %15 : vector<40x32xf32>
    %cst_15 = arith.constant 0.000000e+00 : f32
    %17 = vector.broadcast %cst_15 : f32 to vector<40x32xf32>
    %18 = arith.maximumf %16, %17 : vector<40x32xf32>
    %19 = arith.truncf %18 : vector<40x32xf32> to vector<40x32xbf16>
    %c0_16 = arith.constant 0 : index
    %c0_17 = arith.constant 0 : index
    %20 = vector.load %arg8[%c0_16, %c0_17] : memref<32x128xbf16, #tpu.memory_space<vmem>>, vector<32x128xbf16>
    %cst_18 = arith.constant dense<0.000000e+00> : vector<40x128xf32>
    %21 = tpu.matmul %19, %20, %cst_18 {dimension_numbers = #tpu.dot_dimension_numbers<[1], [0], [0], [1], [0, 0, 1, 1], [], []>} : vector<40x32xbf16>, vector<32x128xbf16>, vector<40x128xf32> -> vector<40x128xf32>
    %c0_19 = arith.constant 0 : index
    %c0_20 = arith.constant 0 : index
    %22 = vector.load %arg9[%c0_19, %c0_20] : memref<1x128xf32, #tpu.memory_space<vmem>>, vector<1x128xf32>
    %23 = vector.broadcast %22 : vector<1x128xf32> to vector<40x128xf32>
    %24 = arith.addf %21, %23 : vector<40x128xf32>
    %25 = tpu.iota {dimensions = array<i32: 1>} : vector<1x128xi32>
    %c32_i32 = arith.constant 32 : i32
    %26 = vector.broadcast %c32_i32 : i32 to vector<1x128xi32>
    %27 = arith.cmpi slt, %25, %26 : vector<1x128xi32>
    %28 = arith.extui %27 : vector<1x128xi1> to vector<1x128xi32>
    %29 = arith.sitofp %28 : vector<1x128xi32> to vector<1x128xf32>
    %30 = vector.broadcast %29 : vector<1x128xf32> to vector<40x128xf32>
    %31 = arith.mulf %24, %30 : vector<40x128xf32>
    %cst_21 = arith.constant dense<0.000000e+00> : vector<40xf32>
    %32 = vector.multi_reduction <add>, %31, %cst_21 [1] : vector<40x128xf32> to vector<40xf32>
    %33 = vector.shape_cast %32 : vector<40xf32> to vector<40x1xf32>
    %cst_22 = arith.constant 3.125000e-02 : f32
    %34 = vector.broadcast %cst_22 : f32 to vector<40x1xf32>
    %35 = arith.mulf %33, %34 : vector<40x1xf32>
    %36 = vector.broadcast %35 : vector<40x1xf32> to vector<40x128xf32>
    %37 = arith.subf %24, %36 : vector<40x128xf32>
    %38 = vector.broadcast %29 : vector<1x128xf32> to vector<40x128xf32>
    %39 = arith.mulf %37, %38 : vector<40x128xf32>
    %40 = arith.mulf %39, %39 : vector<40x128xf32>
    %cst_23 = arith.constant dense<0.000000e+00> : vector<40xf32>
    %41 = vector.multi_reduction <add>, %40, %cst_23 [1] : vector<40x128xf32> to vector<40xf32>
    %42 = vector.shape_cast %41 : vector<40xf32> to vector<40x1xf32>
    %cst_24 = arith.constant 3.125000e-02 : f32
    %43 = vector.broadcast %cst_24 : f32 to vector<40x1xf32>
    %44 = arith.mulf %42, %43 : vector<40x1xf32>
    %cst_25 = arith.constant 9.99999974E-6 : f32
    %45 = vector.broadcast %cst_25 : f32 to vector<40x1xf32>
    %46 = arith.addf %44, %45 : vector<40x1xf32>
    %47 = math.rsqrt %46 : vector<40x1xf32>
    %48 = vector.broadcast %47 : vector<40x1xf32> to vector<40x128xf32>
    %49 = arith.mulf %39, %48 : vector<40x128xf32>
    %c0_26 = arith.constant 0 : index
    %c0_27 = arith.constant 0 : index
    %50 = vector.load %arg10[%c0_26, %c0_27] : memref<1x128xf32, #tpu.memory_space<vmem>>, vector<1x128xf32>
    %51 = vector.broadcast %50 : vector<1x128xf32> to vector<40x128xf32>
    %52 = arith.mulf %49, %51 : vector<40x128xf32>
    %c0_28 = arith.constant 0 : index
    %c0_29 = arith.constant 0 : index
    %53 = vector.load %arg11[%c0_28, %c0_29] : memref<1x128xf32, #tpu.memory_space<vmem>>, vector<1x128xf32>
    %54 = vector.broadcast %53 : vector<1x128xf32> to vector<40x128xf32>
    %55 = arith.addf %52, %54 : vector<40x128xf32>
    %56 = arith.addf %55, %9 : vector<40x128xf32>
    %c0_30 = arith.constant 0 : index
    %c0_31 = arith.constant 0 : index
    %57 = vector.load %arg12[%c0_30, %c0_31] : memref<40x128xf32, #tpu.memory_space<vmem>>, vector<40x128xf32>
    tpu.vector_store %arg12[%c0_30, %c0_31], %56 {strides = array<i32>} : memref<40x128xf32, #tpu.memory_space<vmem>>, vector<40x128xf32>,
    return
  }
  func.func @transform_0(%arg0: i32) -> (i32, i32) {
    %c0_i32 = arith.constant 0 : i32
    %c0_i32_0 = arith.constant 0 : i32
    return %arg0, %c0_i32 : i32, i32
  }
  func.func @transform_1(%arg0: i32) -> (i32, i32) {
    %c0_i32 = arith.constant 0 : i32
    %c0_i32_0 = arith.constant 0 : i32
    return %arg0, %c0_i32 : i32, i32
  }
  func.func @transform_2(%arg0: i32) -> (i32, i32) {
    %c0_i32 = arith.constant 0 : i32
    %c0_i32_0 = arith.constant 0 : i32
    return %arg0, %c0_i32 : i32, i32
  }
  func.func @transform_3(%arg0: i32) -> (i32, i32) {
    %c0_i32 = arith.constant 0 : i32
    %c0_i32_0 = arith.constant 0 : i32
    %c0_i32_1 = arith.constant 0 : i32
    return %c0_i32, %c0_i32_0 : i32, i32
  }
  func.func @transform_4(%arg0: i32) -> (i32, i32) {
    %c0_i32 = arith.constant 0 : i32
    %c0_i32_0 = arith.constant 0 : i32
    %c0_i32_1 = arith.constant 0 : i32
    return %c0_i32, %c0_i32_0 : i32, i32
  }
  func.func @transform_5(%arg0: i32) -> (i32, i32) {
    %c0_i32 = arith.constant 0 : i32
    %c0_i32_0 = arith.constant 0 : i32
    %c0_i32_1 = arith.constant 0 : i32
    return %c0_i32, %c0_i32_0 : i32, i32
  }
  func.func @transform_6(%arg0: i32) -> (i32, i32) {
    %c0_i32 = arith.constant 0 : i32
    %c0_i32_0 = arith.constant 0 : i32
    %c0_i32_1 = arith.constant 0 : i32
    return %c0_i32, %c0_i32_0 : i32, i32
  }
  func.func @transform_7(%arg0: i32) -> (i32, i32) {
    %c0_i32 = arith.constant 0 : i32
    %c0_i32_0 = arith.constant 0 : i32
    %c0_i32_1 = arith.constant 0 : i32
    return %c0_i32, %c0_i32_0 : i32, i32
  }
  func.func @transform_8(%arg0: i32) -> (i32, i32) {
    %c0_i32 = arith.constant 0 : i32
    %c0_i32_0 = arith.constant 0 : i32
    %c0_i32_1 = arith.constant 0 : i32
    return %c0_i32, %c0_i32_0 : i32, i32
  }
  func.func @transform_9(%arg0: i32) -> (i32, i32) {
    %c0_i32 = arith.constant 0 : i32
    %c0_i32_0 = arith.constant 0 : i32
    %c0_i32_1 = arith.constant 0 : i32
    return %c0_i32, %c0_i32_0 : i32, i32
  }
  func.func @transform_10(%arg0: i32) -> (i32, i32) {
    %c0_i32 = arith.constant 0 : i32
    %c0_i32_0 = arith.constant 0 : i32
    %c0_i32_1 = arith.constant 0 : i32
    return %c0_i32, %c0_i32_0 : i32, i32
  }
  func.func @transform_11(%arg0: i32) -> (i32, i32) {
    %c0_i32 = arith.constant 0 : i32
    %c0_i32_0 = arith.constant 0 : i32
    return %arg0, %c0_i32 : i32, i32
  }
}

module attributes {stable_mosaic.version = 11 : i64} {
  func.func @_mlp_block_kernel(%arg0: i32, %arg1: memref<16x128xf32, #tpu.memory_space<vmem>>, %arg2: memref<16x128xf32, #tpu.memory_space<vmem>>, %arg3: memref<128x32xbf16, #tpu.memory_space<vmem>>, %arg4: memref<128x32xbf16, #tpu.memory_space<vmem>>, %arg5: memref<1x32xf32, #tpu.memory_space<vmem>>, %arg6: memref<32x128xbf16, #tpu.memory_space<vmem>>, %arg7: memref<1x128xf32, #tpu.memory_space<vmem>>, %arg8: memref<1x128xf32, #tpu.memory_space<vmem>>, %arg9: memref<1x128xf32, #tpu.memory_space<vmem>>, %arg10: memref<16x128xf32, #tpu.memory_space<vmem>>) attributes {dimension_semantics = [#tpu.dimension_semantics<parallel>], iteration_bounds = array<i64: 1>, scalar_prefetch = 0 : i64, scratch_operands = 0 : i64, tpu.core_type = #tpu.core_type<tc>, window_params = [{transform_indices = @transform_0, window_bounds = array<i64: 16, 128>}, {transform_indices = @transform_1, window_bounds = array<i64: 16, 128>}, {pipeline_mode = #tpu.pipeline_mode<synchronous>, transform_indices = @transform_2, window_bounds = array<i64: 128, 32>}, {pipeline_mode = #tpu.pipeline_mode<synchronous>, transform_indices = @transform_3, window_bounds = array<i64: 128, 32>}, {pipeline_mode = #tpu.pipeline_mode<synchronous>, transform_indices = @transform_4, window_bounds = array<i64: 1, 32>}, {pipeline_mode = #tpu.pipeline_mode<synchronous>, transform_indices = @transform_5, window_bounds = array<i64: 32, 128>}, {pipeline_mode = #tpu.pipeline_mode<synchronous>, transform_indices = @transform_6, window_bounds = array<i64: 1, 128>}, {pipeline_mode = #tpu.pipeline_mode<synchronous>, transform_indices = @transform_7, window_bounds = array<i64: 1, 128>}, {pipeline_mode = #tpu.pipeline_mode<synchronous>, transform_indices = @transform_8, window_bounds = array<i64: 1, 128>}, {transform_indices = @transform_9, window_bounds = array<i64: 16, 128>}]} {
    %c0 = arith.constant 0 : index
    %c0_0 = arith.constant 0 : index
    %0 = vector.load %arg1[%c0, %c0_0] : memref<16x128xf32, #tpu.memory_space<vmem>>, vector<16x128xf32>
    %1 = arith.truncf %0 : vector<16x128xf32> to vector<16x128xbf16>
    %c0_1 = arith.constant 0 : index
    %c0_2 = arith.constant 0 : index
    %2 = vector.load %arg3[%c0_1, %c0_2] : memref<128x32xbf16, #tpu.memory_space<vmem>>, vector<128x32xbf16>
    %cst = arith.constant dense<0.000000e+00> : vector<16x32xf32>
    %3 = tpu.matmul %1, %2, %cst {dimension_numbers = #tpu.dot_dimension_numbers<[1], [0], [0], [1], [0, 0, 1, 1], [], []>} : vector<16x128xbf16>, vector<128x32xbf16>, vector<16x32xf32> -> vector<16x32xf32>
    %c0_3 = arith.constant 0 : index
    %c0_4 = arith.constant 0 : index
    %4 = vector.load %arg2[%c0_3, %c0_4] : memref<16x128xf32, #tpu.memory_space<vmem>>, vector<16x128xf32>
    %5 = arith.truncf %4 : vector<16x128xf32> to vector<16x128xbf16>
    %c0_5 = arith.constant 0 : index
    %c0_6 = arith.constant 0 : index
    %6 = vector.load %arg4[%c0_5, %c0_6] : memref<128x32xbf16, #tpu.memory_space<vmem>>, vector<128x32xbf16>
    %cst_7 = arith.constant dense<0.000000e+00> : vector<16x32xf32>
    %7 = tpu.matmul %5, %6, %cst_7 {dimension_numbers = #tpu.dot_dimension_numbers<[1], [0], [0], [1], [0, 0, 1, 1], [], []>} : vector<16x128xbf16>, vector<128x32xbf16>, vector<16x32xf32> -> vector<16x32xf32>
    %8 = arith.addf %3, %7 : vector<16x32xf32>
    %c0_8 = arith.constant 0 : index
    %c0_9 = arith.constant 0 : index
    %9 = vector.load %arg5[%c0_8, %c0_9] : memref<1x32xf32, #tpu.memory_space<vmem>>, vector<1x32xf32>
    %10 = vector.broadcast %9 : vector<1x32xf32> to vector<16x32xf32>
    %11 = arith.addf %8, %10 : vector<16x32xf32>
    %cst_10 = arith.constant 0.000000e+00 : f32
    %12 = vector.broadcast %cst_10 : f32 to vector<16x32xf32>
    %13 = arith.maximumf %11, %12 : vector<16x32xf32>
    %14 = arith.truncf %13 : vector<16x32xf32> to vector<16x32xbf16>
    %c0_11 = arith.constant 0 : index
    %c0_12 = arith.constant 0 : index
    %15 = vector.load %arg6[%c0_11, %c0_12] : memref<32x128xbf16, #tpu.memory_space<vmem>>, vector<32x128xbf16>
    %cst_13 = arith.constant dense<0.000000e+00> : vector<16x128xf32>
    %16 = tpu.matmul %14, %15, %cst_13 {dimension_numbers = #tpu.dot_dimension_numbers<[1], [0], [0], [1], [0, 0, 1, 1], [], []>} : vector<16x32xbf16>, vector<32x128xbf16>, vector<16x128xf32> -> vector<16x128xf32>
    %c0_14 = arith.constant 0 : index
    %c0_15 = arith.constant 0 : index
    %17 = vector.load %arg7[%c0_14, %c0_15] : memref<1x128xf32, #tpu.memory_space<vmem>>, vector<1x128xf32>
    %18 = vector.broadcast %17 : vector<1x128xf32> to vector<16x128xf32>
    %19 = arith.addf %16, %18 : vector<16x128xf32>
    %20 = tpu.iota {dimensions = array<i32: 1>} : vector<1x128xi32>
    %c32_i32 = arith.constant 32 : i32
    %21 = vector.broadcast %c32_i32 : i32 to vector<1x128xi32>
    %22 = arith.cmpi slt, %20, %21 : vector<1x128xi32>
    %23 = arith.extui %22 : vector<1x128xi1> to vector<1x128xi32>
    %24 = arith.sitofp %23 : vector<1x128xi32> to vector<1x128xf32>
    %25 = vector.broadcast %24 : vector<1x128xf32> to vector<16x128xf32>
    %26 = arith.mulf %19, %25 : vector<16x128xf32>
    %cst_16 = arith.constant dense<0.000000e+00> : vector<16xf32>
    %27 = vector.multi_reduction <add>, %26, %cst_16 [1] : vector<16x128xf32> to vector<16xf32>
    %28 = vector.shape_cast %27 : vector<16xf32> to vector<16x1xf32>
    %cst_17 = arith.constant 3.125000e-02 : f32
    %29 = vector.broadcast %cst_17 : f32 to vector<16x1xf32>
    %30 = arith.mulf %28, %29 : vector<16x1xf32>
    %31 = vector.broadcast %30 : vector<16x1xf32> to vector<16x128xf32>
    %32 = arith.subf %19, %31 : vector<16x128xf32>
    %33 = vector.broadcast %24 : vector<1x128xf32> to vector<16x128xf32>
    %34 = arith.mulf %32, %33 : vector<16x128xf32>
    %35 = arith.mulf %34, %34 : vector<16x128xf32>
    %cst_18 = arith.constant dense<0.000000e+00> : vector<16xf32>
    %36 = vector.multi_reduction <add>, %35, %cst_18 [1] : vector<16x128xf32> to vector<16xf32>
    %37 = vector.shape_cast %36 : vector<16xf32> to vector<16x1xf32>
    %cst_19 = arith.constant 3.125000e-02 : f32
    %38 = vector.broadcast %cst_19 : f32 to vector<16x1xf32>
    %39 = arith.mulf %37, %38 : vector<16x1xf32>
    %cst_20 = arith.constant 9.99999974E-6 : f32
    %40 = vector.broadcast %cst_20 : f32 to vector<16x1xf32>
    %41 = arith.addf %39, %40 : vector<16x1xf32>
    %42 = math.rsqrt %41 : vector<16x1xf32>
    %43 = vector.broadcast %42 : vector<16x1xf32> to vector<16x128xf32>
    %44 = arith.mulf %34, %43 : vector<16x128xf32>
    %c0_21 = arith.constant 0 : index
    %c0_22 = arith.constant 0 : index
    %45 = vector.load %arg8[%c0_21, %c0_22] : memref<1x128xf32, #tpu.memory_space<vmem>>, vector<1x128xf32>
    %46 = vector.broadcast %45 : vector<1x128xf32> to vector<16x128xf32>
    %47 = arith.mulf %44, %46 : vector<16x128xf32>
    %c0_23 = arith.constant 0 : index
    %c0_24 = arith.constant 0 : index
    %48 = vector.load %arg9[%c0_23, %c0_24] : memref<1x128xf32, #tpu.memory_space<vmem>>, vector<1x128xf32>
    %49 = vector.broadcast %48 : vector<1x128xf32> to vector<16x128xf32>
    %50 = arith.addf %47, %49 : vector<16x128xf32>
    %51 = arith.addf %50, %0 : vector<16x128xf32>
    %c0_25 = arith.constant 0 : index
    %c0_26 = arith.constant 0 : index
    %52 = vector.load %arg10[%c0_25, %c0_26] : memref<16x128xf32, #tpu.memory_space<vmem>>, vector<16x128xf32>
    tpu.vector_store %arg10[%c0_25, %c0_26], %51 {strides = array<i32>} : memref<16x128xf32, #tpu.memory_space<vmem>>, vector<16x128xf32>,
    return
  }
  func.func @transform_0(%arg0: i32) -> (i32, i32) {
    %c0_i32 = arith.constant 0 : i32
    %c0_i32_0 = arith.constant 0 : i32
    return %arg0, %c0_i32 : i32, i32
  }
  func.func @transform_1(%arg0: i32) -> (i32, i32) {
    %c0_i32 = arith.constant 0 : i32
    %c0_i32_0 = arith.constant 0 : i32
    return %arg0, %c0_i32 : i32, i32
  }
  func.func @transform_2(%arg0: i32) -> (i32, i32) {
    %c0_i32 = arith.constant 0 : i32
    %c0_i32_0 = arith.constant 0 : i32
    %c0_i32_1 = arith.constant 0 : i32
    return %c0_i32, %c0_i32_0 : i32, i32
  }
  func.func @transform_3(%arg0: i32) -> (i32, i32) {
    %c0_i32 = arith.constant 0 : i32
    %c0_i32_0 = arith.constant 0 : i32
    %c0_i32_1 = arith.constant 0 : i32
    return %c0_i32, %c0_i32_0 : i32, i32
  }
  func.func @transform_4(%arg0: i32) -> (i32, i32) {
    %c0_i32 = arith.constant 0 : i32
    %c0_i32_0 = arith.constant 0 : i32
    %c0_i32_1 = arith.constant 0 : i32
    return %c0_i32, %c0_i32_0 : i32, i32
  }
  func.func @transform_5(%arg0: i32) -> (i32, i32) {
    %c0_i32 = arith.constant 0 : i32
    %c0_i32_0 = arith.constant 0 : i32
    %c0_i32_1 = arith.constant 0 : i32
    return %c0_i32, %c0_i32_0 : i32, i32
  }
  func.func @transform_6(%arg0: i32) -> (i32, i32) {
    %c0_i32 = arith.constant 0 : i32
    %c0_i32_0 = arith.constant 0 : i32
    %c0_i32_1 = arith.constant 0 : i32
    return %c0_i32, %c0_i32_0 : i32, i32
  }
  func.func @transform_7(%arg0: i32) -> (i32, i32) {
    %c0_i32 = arith.constant 0 : i32
    %c0_i32_0 = arith.constant 0 : i32
    %c0_i32_1 = arith.constant 0 : i32
    return %c0_i32, %c0_i32_0 : i32, i32
  }
  func.func @transform_8(%arg0: i32) -> (i32, i32) {
    %c0_i32 = arith.constant 0 : i32
    %c0_i32_0 = arith.constant 0 : i32
    %c0_i32_1 = arith.constant 0 : i32
    return %c0_i32, %c0_i32_0 : i32, i32
  }
  func.func @transform_9(%arg0: i32) -> (i32, i32) {
    %c0_i32 = arith.constant 0 : i32
    %c0_i32_0 = arith.constant 0 : i32
    return %arg0, %c0_i32 : i32, i32
  }
}

module attributes {stable_mosaic.version = 11 : i64} {
  func.func @_mlp_block_kernel(%arg0: i32, %arg1: memref<16x128xf32, #tpu.memory_space<vmem>>, %arg2: memref<128x32xbf16, #tpu.memory_space<vmem>>, %arg3: memref<1x32xf32, #tpu.memory_space<vmem>>, %arg4: memref<32x128xbf16, #tpu.memory_space<vmem>>, %arg5: memref<1x128xf32, #tpu.memory_space<vmem>>, %arg6: memref<16x128xf32, #tpu.memory_space<vmem>>) attributes {dimension_semantics = [#tpu.dimension_semantics<parallel>], iteration_bounds = array<i64: 1>, scalar_prefetch = 0 : i64, scratch_operands = 0 : i64, tpu.core_type = #tpu.core_type<tc>, window_params = [{transform_indices = @transform_0, window_bounds = array<i64: 16, 128>}, {pipeline_mode = #tpu.pipeline_mode<synchronous>, transform_indices = @transform_1, window_bounds = array<i64: 128, 32>}, {pipeline_mode = #tpu.pipeline_mode<synchronous>, transform_indices = @transform_2, window_bounds = array<i64: 1, 32>}, {pipeline_mode = #tpu.pipeline_mode<synchronous>, transform_indices = @transform_3, window_bounds = array<i64: 32, 128>}, {pipeline_mode = #tpu.pipeline_mode<synchronous>, transform_indices = @transform_4, window_bounds = array<i64: 1, 128>}, {transform_indices = @transform_5, window_bounds = array<i64: 16, 128>}]} {
    %c0 = arith.constant 0 : index
    %c0_0 = arith.constant 0 : index
    %0 = vector.load %arg1[%c0, %c0_0] : memref<16x128xf32, #tpu.memory_space<vmem>>, vector<16x128xf32>
    %1 = arith.truncf %0 : vector<16x128xf32> to vector<16x128xbf16>
    %c0_1 = arith.constant 0 : index
    %c0_2 = arith.constant 0 : index
    %2 = vector.load %arg2[%c0_1, %c0_2] : memref<128x32xbf16, #tpu.memory_space<vmem>>, vector<128x32xbf16>
    %cst = arith.constant dense<0.000000e+00> : vector<16x32xf32>
    %3 = tpu.matmul %1, %2, %cst {dimension_numbers = #tpu.dot_dimension_numbers<[1], [0], [0], [1], [0, 0, 1, 1], [], []>} : vector<16x128xbf16>, vector<128x32xbf16>, vector<16x32xf32> -> vector<16x32xf32>
    %c0_3 = arith.constant 0 : index
    %c0_4 = arith.constant 0 : index
    %4 = vector.load %arg3[%c0_3, %c0_4] : memref<1x32xf32, #tpu.memory_space<vmem>>, vector<1x32xf32>
    %5 = vector.broadcast %4 : vector<1x32xf32> to vector<16x32xf32>
    %6 = arith.addf %3, %5 : vector<16x32xf32>
    %cst_5 = arith.constant 0.000000e+00 : f32
    %7 = vector.broadcast %cst_5 : f32 to vector<16x32xf32>
    %8 = arith.maximumf %6, %7 : vector<16x32xf32>
    %9 = arith.truncf %8 : vector<16x32xf32> to vector<16x32xbf16>
    %c0_6 = arith.constant 0 : index
    %c0_7 = arith.constant 0 : index
    %10 = vector.load %arg4[%c0_6, %c0_7] : memref<32x128xbf16, #tpu.memory_space<vmem>>, vector<32x128xbf16>
    %cst_8 = arith.constant dense<0.000000e+00> : vector<16x128xf32>
    %11 = tpu.matmul %9, %10, %cst_8 {dimension_numbers = #tpu.dot_dimension_numbers<[1], [0], [0], [1], [0, 0, 1, 1], [], []>} : vector<16x32xbf16>, vector<32x128xbf16>, vector<16x128xf32> -> vector<16x128xf32>
    %c0_9 = arith.constant 0 : index
    %c0_10 = arith.constant 0 : index
    %12 = vector.load %arg5[%c0_9, %c0_10] : memref<1x128xf32, #tpu.memory_space<vmem>>, vector<1x128xf32>
    %13 = vector.broadcast %12 : vector<1x128xf32> to vector<16x128xf32>
    %14 = arith.addf %11, %13 : vector<16x128xf32>
    %c0_11 = arith.constant 0 : index
    %c0_12 = arith.constant 0 : index
    %15 = vector.load %arg6[%c0_11, %c0_12] : memref<16x128xf32, #tpu.memory_space<vmem>>, vector<16x128xf32>
    tpu.vector_store %arg6[%c0_11, %c0_12], %14 {strides = array<i32>} : memref<16x128xf32, #tpu.memory_space<vmem>>, vector<16x128xf32>,
    return
  }
  func.func @transform_0(%arg0: i32) -> (i32, i32) {
    %c0_i32 = arith.constant 0 : i32
    %c0_i32_0 = arith.constant 0 : i32
    return %arg0, %c0_i32 : i32, i32
  }
  func.func @transform_1(%arg0: i32) -> (i32, i32) {
    %c0_i32 = arith.constant 0 : i32
    %c0_i32_0 = arith.constant 0 : i32
    %c0_i32_1 = arith.constant 0 : i32
    return %c0_i32, %c0_i32_0 : i32, i32
  }
  func.func @transform_2(%arg0: i32) -> (i32, i32) {
    %c0_i32 = arith.constant 0 : i32
    %c0_i32_0 = arith.constant 0 : i32
    %c0_i32_1 = arith.constant 0 : i32
    return %c0_i32, %c0_i32_0 : i32, i32
  }
  func.func @transform_3(%arg0: i32) -> (i32, i32) {
    %c0_i32 = arith.constant 0 : i32
    %c0_i32_0 = arith.constant 0 : i32
    %c0_i32_1 = arith.constant 0 : i32
    return %c0_i32, %c0_i32_0 : i32, i32
  }
  func.func @transform_4(%arg0: i32) -> (i32, i32) {
    %c0_i32 = arith.constant 0 : i32
    %c0_i32_0 = arith.constant 0 : i32
    %c0_i32_1 = arith.constant 0 : i32
    return %c0_i32, %c0_i32_0 : i32, i32
  }
  func.func @transform_5(%arg0: i32) -> (i32, i32) {
    %c0_i32 = arith.constant 0 : i32
    %c0_i32_0 = arith.constant 0 : i32
    return %arg0, %c0_i32 : i32, i32
  }
}

</mosaic_0001>

<llo_original>
// kernel: _lambda_.7
$region0: #{_lambda_.7}
  #allocation0 [shape = 'u32[]', space=smem, size = 0x4, offset = 0x4, fixed_abs, tag = 'smem constant byte address 0x4 - core index']
  #allocation1 [shape = 'u32[72,128]{1,0:T(1,128)}', space=vmem, size = 0x9000, scoped, tag = 'internal scratch']
  %s0 = inlined_call_operand.vmem [shape: f32[16,12], index: 0, kind: input, shape index: {}]
  %s1 = inlined_call_operand.vmem [shape: bf16[12,32], index: 1, kind: input, shape index: {}]
  %s2 = inlined_call_operand.vmem [shape: f32[1,32], index: 2, kind: input, shape index: {}]
  %s3 = inlined_call_operand.vmem [shape: bf16[32,128], index: 3, kind: input, shape index: {}]
  %s4 = inlined_call_operand.vmem [shape: f32[1,128], index: 4, kind: input, shape index: {}]
  %s5 = inlined_call_operand.vmem [shape: f32[1,128], index: 5, kind: input, shape index: {}]
  %s6 = inlined_call_operand.vmem [shape: f32[1,128], index: 6, kind: input, shape index: {}]
  %s7 = inlined_call_operand.vmem [shape: f32[16,128], index: 7, kind: output, shape index: {}]
  %s8 = sld [smem:[#allocation0]]
  $region38: #{_lambda_.7} parent=0
    _
  %s10 = ssub.s32 1, %s8
  %s11 = scalar_select 0, %s10, %s8
  // Predicated region
  $region2: #{_lambda_.7} parent=0 // pred_check
    _
  $region3: #{_lambda_.7} parent=0 // pred_check_branch
    %13 = sbr.rel (0) target = $region5
  $region4: #{_lambda_.7} parent=0 // pred_region
    _
  $region5: #{_lambda_.7} parent=0 // pred_fallthru
    _
  // Predicated region
  $region6: #{_lambda_.7} parent=0 // pred_check
    _
  $region7: #{_lambda_.7} parent=0 // pred_check_branch
    %15 = sbr.rel (0) target = $region9
  $region8: #{_lambda_.7} parent=0 // pred_region
    _
  $region9: #{_lambda_.7} parent=0 // pred_fallthru
    _
  // Predicated region
  $region10: #{_lambda_.7} parent=0 // pred_check
    _
  $region11: #{_lambda_.7} parent=0 // pred_check_branch
    %17 = sbr.rel (0) target = $region13
  $region12: #{_lambda_.7} parent=0 // pred_region
    _
  $region13: #{_lambda_.7} parent=0 // pred_fallthru
    _
  // Predicated region
  $region14: #{_lambda_.7} parent=0 // pred_check
    _
  $region15: #{_lambda_.7} parent=0 // pred_check_branch
    %19 = sbr.rel (0) target = $region17
  $region16: #{_lambda_.7} parent=0 // pred_region
    _
  $region17: #{_lambda_.7} parent=0 // pred_fallthru
    _
  // Predicated region
  $region18: #{_lambda_.7} parent=0 // pred_check
    _
  $region19: #{_lambda_.7} parent=0 // pred_check_branch
    %21 = sbr.rel (0) target = $region21
  $region20: #{_lambda_.7} parent=0 // pred_region
    _
  $region21: #{_lambda_.7} parent=0 // pred_fallthru
    _
  // Predicated region
  $region22: #{_lambda_.7} parent=0 // pred_check
    _
  $region23: #{_lambda_.7} parent=0 // pred_check_branch
    %23 = sbr.rel (0) target = $region25
  $region24: #{_lambda_.7} parent=0 // pred_region
    _
  $region25: #{_lambda_.7} parent=0 // pred_fallthru
    _
  // Predicated region
  $region26: #{_lambda_.7} parent=0 // pred_check
    _
  $region27: #{_lambda_.7} parent=0 // pred_check_branch
    %25 = sbr.rel (0) target = $region29
  $region28: #{_lambda_.7} parent=0 // pred_region
    _
  $region29: #{_lambda_.7} parent=0 // pred_fallthru
    _
  %v27 = vld [vmem:[%s0] sm:$0xff]
  %v28 = vld [vmem:[%s0 + $0x8] sm:$0xff]
  %v29 = vpack.c.bf16 %v28, %v27
  %v30 = vld [vmem:[%s1] sm:$0xf]
  %v31 = vld [vmem:[%s1 + $0x4] sm:$0x3]
  %v32 = vld [vmem:[%s2] sm:$0x1]
  %v34 = vperm.slane %v32, 0
  %v38 = vunpack.c.l.b16 %v30
  %v39 = vunpack.c.l.b16 %v31
  %v40 = vpack.c.b16 %v39, %v38
  %vm41 = vcmask 97280
  %v43 = vsel %vm41, %v29, 0
  %vm45 = vcmask 1045504
  %v47 = vsel %vm45, %v40, 0
  %49 = vmatpush.bf16.msra.mxu0 0
  %50 = vmatpush.bf16.msra.mxu0 0
  %51 = vmatpush.bf16.msra.mxu0 0
  %52 = vmatpush.bf16.msra.mxu0 0
  %53 = vmatpush.bf16.msra.mxu0 0
  %54 = vmatpush.bf16.msra.mxu0 0
  %55 = vmatpush.bf16.msra.mxu0 0
  %56 = vmatpush.bf16.msra.mxu0 %v47
  %57 = vmatmul.bf16.gmra.mxu0 %v43
  %v58 = vpop.f32.mrf.mxu0
  %v59 = vadd.f32 %v34, %v58
  %v60 = vpop.f32.mrf.mxu0
  %v61 = vadd.f32 %v34, %v60
  %62 = vdwg.mxu0
  %v63 = vmax.f32 %v59, 0.0
  %v64 = vmax.f32 %v61, 0.0
  %v65 = vpack.c.bf16 %v64, %v63
  %v66 = vld [vmem:[%s3] sm:$0xf]
  %v67 = vld [vmem:[%s3 + $0x4] sm:$0xf]
  %v68 = vld [vmem:[%s3 + $0x8] sm:$0xf]
  %v69 = vld [vmem:[%s3 + $0xc] sm:$0xf]
  %v70 = vld [vmem:[%s4] sm:$0x1]
  %v72 = vperm.slane %v70, 0
  %v78 = vunpack.c.l.b16 %v66
  %v79 = vunpack.c.l.b16 %v67
  %v80 = vunpack.c.l.b16 %v68
  %v81 = vunpack.c.l.b16 %v69
  %v82 = vpack.c.b16 %v79, %v78
  %v83 = vpack.c.b16 %v81, %v80
  %vm86 = vcmask 261120
  %v88 = vsel %vm86, %v65, 0
  %90 = vmatpush.bf16.msra.mxu0 0
  %91 = vmatpush.bf16.msra.mxu0 0
  %92 = vmatpush.bf16.msra.mxu0 0
  %93 = vmatpush.bf16.msra.mxu0 0
  %94 = vmatpush.bf16.msra.mxu0 0
  %95 = vmatpush.bf16.msra.mxu0 0
  %96 = vmatpush.bf16.msra.mxu0 %v83
  %97 = vmatpush.bf16.msra.mxu0 %v82
  %98 = vmatmul.bf16.gmra.mxu0 %v88
  %v99 = vpop.f32.mrf.mxu0
  %v100 = vadd.f32 %v72, %v99
  %v101 = vpop.f32.mrf.mxu0
  %v102 = vadd.f32 %v72, %v101
  %103 = vdwg.mxu0
  %v104 = vlaneseq
  %v105 = vand.u32 %v104, 127
  %vm106 = vcmp.lt.s32.totalorder %v105, 32
  %v107 = vsel %vm106, 1, 0
  %v108 = vcvt.s32.f32 %v107
  %v109 = vmul.f32 %v100, %v108
  %v110 = vmul.f32 %v102, %v108
  %111 = vadd.xlane.f32.xlu0 %v109
  %v112 = vpop.xlane.xlu0 %111
  %113 = vadd.xlane.f32.xlu0 %v110
  %v114 = vpop.xlane.xlu0 %113
  %v115 = vmul.f32 %v112, 0.03125
  %v116 = vmul.f32 %v114, 0.03125
  %v117 = vsub.f32 %v100, %v115
  %v118 = vsub.f32 %v102, %v116
  %v119 = vmul.f32 %v117, %v108
  %v120 = vmul.f32 %v118, %v108
  %v121 = vmul.f32 %v119, %v119
  %v122 = vmul.f32 %v120, %v120
  %123 = vadd.xlane.f32.xlu0 %v121
  %v124 = vpop.xlane.xlu0 %123
  %125 = vadd.xlane.f32.xlu0 %v122
  %v126 = vpop.xlane.xlu0 %125
  %v127 = vmul.f32 %v124, 0.03125
  %v128 = vmul.f32 %v126, 0.03125
  %v129 = vadd.f32 %v127, 1e-05
  %v130 = vadd.f32 %v128, 1e-05
  %v131 = vrsqrt.pop %v129
  %v132 = vmul.f32 %v131, %v129
  %v133 = vmul.f32 %v132, %v131
  %v134 = vmul.f32 0.5, %v133
  %v135 = vsub.f32 1.5, %v134
  %v136 = vmul.f32 %v131, %v135
  %vm137 = vweird.f32 %v129
  %vm138 = vweird.f32 %v131
  %vm139 = vmor %vm137, %vm138
  %v140 = vsel %vm139, %v131, %v136
  %v141 = vrsqrt.pop %v130
  %v142 = vmul.f32 %v141, %v130
  %v143 = vmul.f32 %v142, %v141
  %v144 = vmul.f32 0.5, %v143
  %v145 = vsub.f32 1.5, %v144
  %v146 = vmul.f32 %v141, %v145
  %vm147 = vweird.f32 %v130
  %vm148 = vweird.f32 %v141
  %vm149 = vmor %vm147, %vm148
  %v150 = vsel %vm149, %v141, %v146
  %v151 = vmul.f32 %v119, %v140
  %v152 = vmul.f32 %v120, %v150
  %v153 = vld [vmem:[%s5] sm:$0x1]
  %v155 = vperm.slane %v153, 0
  %v157 = vmul.f32 %v151, %v155
  %v158 = vmul.f32 %v152, %v155
  %v159 = vld [vmem:[%s6] sm:$0x1]
  %v161 = vperm.slane %v159, 0
  %v163 = vadd.f32 %v157, %v161
  %v164 = vadd.f32 %v158, %v161
  %165 = vst [vmem:[%s7] sm:$0xff] %v163
  %166 = vst [vmem:[%s7 + $0x8] sm:$0xff] %v164
  // Predicated region
  $region30: #{_lambda_.7} parent=0 // pred_check
    _
  $region31: #{_lambda_.7} parent=0 // pred_check_branch
    %168 = sbr.rel (0) target = $region33
  $region32: #{_lambda_.7} parent=0 // pred_region
    _
  $region33: #{_lambda_.7} parent=0 // pred_fallthru
    _
  // Predicated region
  $region34: #{_lambda_.7} parent=0 // pred_check
    _
  $region35: #{_lambda_.7} parent=0 // pred_check_branch
    %170 = sbr.rel (0) target = $region37
  $region36: #{_lambda_.7} parent=0 // pred_region
    _
  $region37: #{_lambda_.7} parent=0 // pred_fallthru
    _

// kernel: _lambda_.8
$region0: #{_lambda_.8}
  #allocation0 [shape = 'u32[]', space=smem, size = 0x4, offset = 0x4, fixed_abs, tag = 'smem constant byte address 0x4 - core index']
  #allocation1 [shape = 'u32[72,128]{1,0:T(1,128)}', space=vmem, size = 0x9000, scoped, tag = 'internal scratch']
  %s0 = inlined_call_operand.vmem [shape: f32[40,7], index: 0, kind: input, shape index: {}]
  %s1 = inlined_call_operand.vmem [shape: bf16[7,32], index: 1, kind: input, shape index: {}]
  %s2 = inlined_call_operand.vmem [shape: f32[1,32], index: 2, kind: input, shape index: {}]
  %s3 = inlined_call_operand.vmem [shape: bf16[32,128], index: 3, kind: input, shape index: {}]
  %s4 = inlined_call_operand.vmem [shape: f32[1,128], index: 4, kind: input, shape index: {}]
  %s5 = inlined_call_operand.vmem [shape: f32[1,128], index: 5, kind: input, shape index: {}]
  %s6 = inlined_call_operand.vmem [shape: f32[1,128], index: 6, kind: input, shape index: {}]
  %s7 = inlined_call_operand.vmem [shape: f32[40,128], index: 7, kind: output, shape index: {}]
  %s8 = sld [smem:[#allocation0]]
  $region38: #{_lambda_.8} parent=0
    _
  %s10 = ssub.s32 1, %s8
  %s11 = scalar_select 0, %s10, %s8
  // Predicated region
  $region2: #{_lambda_.8} parent=0 // pred_check
    _
  $region3: #{_lambda_.8} parent=0 // pred_check_branch
    %13 = sbr.rel (0) target = $region5
  $region4: #{_lambda_.8} parent=0 // pred_region
    _
  $region5: #{_lambda_.8} parent=0 // pred_fallthru
    _
  // Predicated region
  $region6: #{_lambda_.8} parent=0 // pred_check
    _
  $region7: #{_lambda_.8} parent=0 // pred_check_branch
    %15 = sbr.rel (0) target = $region9
  $region8: #{_lambda_.8} parent=0 // pred_region
    _
  $region9: #{_lambda_.8} parent=0 // pred_fallthru
    _
  // Predicated region
  $region10: #{_lambda_.8} parent=0 // pred_check
    _
  $region11: #{_lambda_.8} parent=0 // pred_check_branch
    %17 = sbr.rel (0) target = $region13
  $region12: #{_lambda_.8} parent=0 // pred_region
    _
  $region13: #{_lambda_.8} parent=0 // pred_fallthru
    _
  // Predicated region
  $region14: #{_lambda_.8} parent=0 // pred_check
    _
  $region15: #{_lambda_.8} parent=0 // pred_check_branch
    %19 = sbr.rel (0) target = $region17
  $region16: #{_lambda_.8} parent=0 // pred_region
    _
  $region17: #{_lambda_.8} parent=0 // pred_fallthru
    _
  // Predicated region
  $region18: #{_lambda_.8} parent=0 // pred_check
    _
  $region19: #{_lambda_.8} parent=0 // pred_check_branch
    %21 = sbr.rel (0) target = $region21
  $region20: #{_lambda_.8} parent=0 // pred_region
    _
  $region21: #{_lambda_.8} parent=0 // pred_fallthru
    _
  // Predicated region
  $region22: #{_lambda_.8} parent=0 // pred_check
    _
  $region23: #{_lambda_.8} parent=0 // pred_check_branch
    %23 = sbr.rel (0) target = $region25
  $region24: #{_lambda_.8} parent=0 // pred_region
    _
  $region25: #{_lambda_.8} parent=0 // pred_fallthru
    _
  // Predicated region
  $region26: #{_lambda_.8} parent=0 // pred_check
    _
  $region27: #{_lambda_.8} parent=0 // pred_check_branch
    %25 = sbr.rel (0) target = $region29
  $region28: #{_lambda_.8} parent=0 // pred_region
    _
  $region29: #{_lambda_.8} parent=0 // pred_fallthru
    _
  %v27 = vld [vmem:[%s0] sm:$0xff]
  %v28 = vld [vmem:[%s0 + $0x8] sm:$0xff]
  %v29 = vld [vmem:[%s0 + $0x10] sm:$0xff]
  %v30 = vld [vmem:[%s0 + $0x18] sm:$0xff]
  %v31 = vld [vmem:[%s0 + $0x20] sm:$0xff]
  %v32 = vpack.c.bf16 %v28, %v27
  %v33 = vpack.c.bf16 %v30, %v29
  %v34 = vpack.c.bf16 %v31, %v31
  %v35 = vld [vmem:[%s1] sm:$0xf]
  %v36 = vld [vmem:[%s2] sm:$0x1]
  %v38 = vperm.slane %v36, 0
  %vm40 = vcmask 56320
  %v42 = vsel %vm40, %v32, 0
  %v45 = vsel %vm40, %v33, 0
  %v48 = vsel %vm40, %v34, 0
  %vm50 = vcmask 1042432
  %vm51 = vcmask 1043456
  %v52 = vsel %vm50, 4294967295, 65535
  %v53 = vsel %vm51, %v52, 0
  %v55 = vand.u32 %v35, %v53
  %57 = vmatpush.bf16.msra.mxu0 0
  %58 = vmatpush.bf16.msra.mxu0 0
  %59 = vmatpush.bf16.msra.mxu0 0
  %60 = vmatpush.bf16.msra.mxu0 0
  %61 = vmatpush.bf16.msra.mxu0 0
  %62 = vmatpush.bf16.msra.mxu0 0
  %63 = vmatpush.bf16.msra.mxu0 0
  %64 = vmatpush.bf16.msra.mxu0 %v55
  %65 = vmatmul.bf16.gmra.mxu0 %v42
  %v66 = vpop.f32.mrf.mxu0
  %v67 = vadd.f32 %v38, %v66
  %v68 = vpop.f32.mrf.mxu0
  %v69 = vadd.f32 %v38, %v68
  %70 = vmatmul.bf16.gmra.mxu0 %v45
  %v71 = vpop.f32.mrf.mxu0
  %v72 = vadd.f32 %v38, %v71
  %v73 = vpop.f32.mrf.mxu0
  %v74 = vadd.f32 %v38, %v73
  %75 = vmatmul.bf16.gmra.mxu0 %v48
  %v76 = vpop.f32.mrf.mxu0
  %v77 = vadd.f32 %v38, %v76
  %v78 = vpop.f32.mrf.mxu0
  %79 = vdwg.mxu0
  %v80 = vmax.f32 %v67, 0.0
  %v81 = vmax.f32 %v69, 0.0
  %v82 = vmax.f32 %v72, 0.0
  %v83 = vmax.f32 %v74, 0.0
  %v84 = vmax.f32 %v77, 0.0
  %v85 = vpack.c.bf16 %v81, %v80
  %v86 = vpack.c.bf16 %v83, %v82
  %v87 = vpack.c.bf16 %v84, %v84
  %v88 = vld [vmem:[%s3] sm:$0xf]
  %v89 = vld [vmem:[%s3 + $0x4] sm:$0xf]
  %v90 = vld [vmem:[%s3 + $0x8] sm:$0xf]
  %v91 = vld [vmem:[%s3 + $0xc] sm:$0xf]
  %v92 = vld [vmem:[%s4] sm:$0x1]
  %v94 = vperm.slane %v92, 0
  %v100 = vunpack.c.l.b16 %v88
  %v101 = vunpack.c.l.b16 %v89
  %v102 = vunpack.c.l.b16 %v90
  %v103 = vunpack.c.l.b16 %v91
  %v104 = vpack.c.b16 %v101, %v100
  %v105 = vpack.c.b16 %v103, %v102
  %vm108 = vcmask 261120
  %v110 = vsel %vm108, %v85, 0
  %v113 = vsel %vm108, %v86, 0
  %v116 = vsel %vm108, %v87, 0
  %118 = vmatpush.bf16.msra.mxu0 0
  %119 = vmatpush.bf16.msra.mxu0 0
  %120 = vmatpush.bf16.msra.mxu0 0
  %121 = vmatpush.bf16.msra.mxu0 0
  %122 = vmatpush.bf16.msra.mxu0 0
  %123 = vmatpush.bf16.msra.mxu0 0
  %124 = vmatpush.bf16.msra.mxu0 %v105
  %125 = vmatpush.bf16.msra.mxu0 %v104
  %126 = vmatmul.bf16.gmra.mxu0 %v110
  %v127 = vpop.f32.mrf.mxu0
  %v128 = vadd.f32 %v94, %v127
  %v129 = vpop.f32.mrf.mxu0
  %v130 = vadd.f32 %v94, %v129
  %131 = vmatmul.bf16.gmra.mxu0 %v113
  %v132 = vpop.f32.mrf.mxu0
  %v133 = vadd.f32 %v94, %v132
  %v134 = vpop.f32.mrf.mxu0
  %v135 = vadd.f32 %v94, %v134
  %136 = vmatmul.bf16.gmra.mxu0 %v116
  %v137 = vpop.f32.mrf.mxu0
  %v138 = vadd.f32 %v94, %v137
  %v139 = vpop.f32.mrf.mxu0
  %140 = vdwg.mxu0
  %v141 = vlaneseq
  %v142 = vand.u32 %v141, 127
  %vm143 = vcmp.lt.s32.totalorder %v142, 32
  %v144 = vsel %vm143, 1, 0
  %v145 = vcvt.s32.f32 %v144
  %v146 = vmul.f32 %v128, %v145
  %v147 = vmul.f32 %v130, %v145
  %v148 = vmul.f32 %v133, %v145
  %v149 = vmul.f32 %v135, %v145
  %v150 = vmul.f32 %v138, %v145
  %151 = vadd.xlane.f32.xlu0 %v146
  %v152 = vpop.xlane.xlu0 %151
  %153 = vadd.xlane.f32.xlu0 %v147
  %v154 = vpop.xlane.xlu0 %153
  %155 = vadd.xlane.f32.xlu0 %v148
  %v156 = vpop.xlane.xlu0 %155
  %157 = vadd.xlane.f32.xlu0 %v149
  %v158 = vpop.xlane.xlu0 %157
  %159 = vadd.xlane.f32.xlu0 %v150
  %v160 = vpop.xlane.xlu0 %159
  %v161 = vmul.f32 %v152, 0.03125
  %v162 = vmul.f32 %v154, 0.03125
  %v163 = vmul.f32 %v156, 0.03125
  %v164 = vmul.f32 %v158, 0.03125
  %v165 = vmul.f32 %v160, 0.03125
  %v166 = vsub.f32 %v128, %v161
  %v167 = vsub.f32 %v130, %v162
  %v168 = vsub.f32 %v133, %v163
  %v169 = vsub.f32 %v135, %v164
  %v170 = vsub.f32 %v138, %v165
  %v171 = vmul.f32 %v166, %v145
  %v172 = vmul.f32 %v167, %v145
  %v173 = vmul.f32 %v168, %v145
  %v174 = vmul.f32 %v169, %v145
  %v175 = vmul.f32 %v170, %v145
  %v176 = vmul.f32 %v171, %v171
  %v177 = vmul.f32 %v172, %v172
  %v178 = vmul.f32 %v173, %v173
  %v179 = vmul.f32 %v174, %v174
  %v180 = vmul.f32 %v175, %v175
  %181 = vadd.xlane.f32.xlu0 %v176
  %v182 = vpop.xlane.xlu0 %181
  %183 = vadd.xlane.f32.xlu0 %v177
  %v184 = vpop.xlane.xlu0 %183
  %185 = vadd.xlane.f32.xlu0 %v178
  %v186 = vpop.xlane.xlu0 %185
  %187 = vadd.xlane.f32.xlu0 %v179
  %v188 = vpop.xlane.xlu0 %187
  %189 = vadd.xlane.f32.xlu0 %v180
  %v190 = vpop.xlane.xlu0 %189
  %v191 = vmul.f32 %v182, 0.03125
  %v192 = vmul.f32 %v184, 0.03125
  %v193 = vmul.f32 %v186, 0.03125
  %v194 = vmul.f32 %v188, 0.03125
  %v195 = vmul.f32 %v190, 0.03125
  %v196 = vadd.f32 %v191, 1e-05
  %v197 = vadd.f32 %v192, 1e-05
  %v198 = vadd.f32 %v193, 1e-05
  %v199 = vadd.f32 %v194, 1e-05
  %v200 = vadd.f32 %v195, 1e-05
  %v201 = vrsqrt.pop %v196
  %v202 = vmul.f32 %v201, %v196
  %v203 = vmul.f32 %v202, %v201
  %v204 = vmul.f32 0.5, %v203
  %v205 = vsub.f32 1.5, %v204
  %v206 = vmul.f32 %v201, %v205
  %vm207 = vweird.f32 %v196
  %vm208 = vweird.f32 %v201
  %vm209 = vmor %vm207, %vm208
  %v210 = vsel %vm209, %v201, %v206
  %v211 = vrsqrt.pop %v197
  %v212 = vmul.f32 %v211, %v197
  %v213 = vmul.f32 %v212, %v211
  %v214 = vmul.f32 0.5, %v213
  %v215 = vsub.f32 1.5, %v214
  %v216 = vmul.f32 %v211, %v215
  %vm217 = vweird.f32 %v197
  %vm218 = vweird.f32 %v211
  %vm219 = vmor %vm217, %vm218
  %v220 = vsel %vm219, %v211, %v216
  %v221 = vrsqrt.pop %v198
  %v222 = vmul.f32 %v221, %v198
  %v223 = vmul.f32 %v222, %v221
  %v224 = vmul.f32 0.5, %v223
  %v225 = vsub.f32 1.5, %v224
  %v226 = vmul.f32 %v221, %v225
  %vm227 = vweird.f32 %v198
  %vm228 = vweird.f32 %v221
  %vm229 = vmor %vm227, %vm228
  %v230 = vsel %vm229, %v221, %v226
  %v231 = vrsqrt.pop %v199
  %v232 = vmul.f32 %v231, %v199
  %v233 = vmul.f32 %v232, %v231
  %v234 = vmul.f32 0.5, %v233
  %v235 = vsub.f32 1.5, %v234
  %v236 = vmul.f32 %v231, %v235
  %vm237 = vweird.f32 %v199
  %vm238 = vweird.f32 %v231
  %vm239 = vmor %vm237, %vm238
  %v240 = vsel %vm239, %v231, %v236
  %v241 = vrsqrt.pop %v200
  %v242 = vmul.f32 %v241, %v200
  %v243 = vmul.f32 %v242, %v241
  %v244 = vmul.f32 0.5, %v243
  %v245 = vsub.f32 1.5, %v244
  %v246 = vmul.f32 %v241, %v245
  %vm247 = vweird.f32 %v200
  %vm248 = vweird.f32 %v241
  %vm249 = vmor %vm247, %vm248
  %v250 = vsel %vm249, %v241, %v246
  %v251 = vmul.f32 %v171, %v210
  %v252 = vmul.f32 %v172, %v220
  %v253 = vmul.f32 %v173, %v230
  %v254 = vmul.f32 %v174, %v240
  %v255 = vmul.f32 %v175, %v250
  %v256 = vld [vmem:[%s5] sm:$0x1]
  %v258 = vperm.slane %v256, 0
  %v260 = vmul.f32 %v251, %v258
  %v261 = vmul.f32 %v252, %v258
  %v262 = vmul.f32 %v253, %v258
  %v263 = vmul.f32 %v254, %v258
  %v264 = vmul.f32 %v255, %v258
  %v265 = vld [vmem:[%s6] sm:$0x1]
  %v267 = vperm.slane %v265, 0
  %v269 = vadd.f32 %v260, %v267
  %v270 = vadd.f32 %v261, %v267
  %v271 = vadd.f32 %v262, %v267
  %v272 = vadd.f32 %v263, %v267
  %v273 = vadd.f32 %v264, %v267
  %274 = vst [vmem:[%s7] sm:$0xff] %v269
  %275 = vst [vmem:[%s7 + $0x8] sm:$0xff] %v270
  %276 = vst [vmem:[%s7 + $0x10] sm:$0xff] %v271
  %277 = vst [vmem:[%s7 + $0x18] sm:$0xff] %v272
  %278 = vst [vmem:[%s7 + $0x20] sm:$0xff] %v273
  // Predicated region
  $region30: #{_lambda_.8} parent=0 // pred_check
    _
  $region31: #{_lambda_.8} parent=0 // pred_check_branch
    %280 = sbr.rel (0) target = $region33
  $region32: #{_lambda_.8} parent=0 // pred_region
    _
  $region33: #{_lambda_.8} parent=0 // pred_fallthru
    _
  // Predicated region
  $region34: #{_lambda_.8} parent=0 // pred_check
    _
  $region35: #{_lambda_.8} parent=0 // pred_check_branch
    %282 = sbr.rel (0) target = $region37
  $region36: #{_lambda_.8} parent=0 // pred_region
    _
  $region37: #{_lambda_.8} parent=0 // pred_fallthru
    _

// kernel: _lambda_.9
$region0: #{_lambda_.9}
  #allocation0 [shape = 'u32[]', space=smem, size = 0x4, offset = 0x4, fixed_abs, tag = 'smem constant byte address 0x4 - core index']
  #allocation1 [shape = 'u32[72,128]{1,0:T(1,128)}', space=vmem, size = 0x9000, scoped, tag = 'internal scratch']
  %s0 = inlined_call_operand.vmem [shape: f32[40,128], index: 0, kind: input, shape index: {}]
  %s1 = inlined_call_operand.vmem [shape: f32[40,128], index: 1, kind: input, shape index: {}]
  %s2 = inlined_call_operand.vmem [shape: f32[40,128], index: 2, kind: input, shape index: {}, may-alias: {2,11}]
  %s3 = inlined_call_operand.vmem [shape: bf16[128,32], index: 3, kind: input, shape index: {}]
  %s4 = inlined_call_operand.vmem [shape: bf16[128,32], index: 4, kind: input, shape index: {}]
  %s5 = inlined_call_operand.vmem [shape: bf16[128,32], index: 5, kind: input, shape index: {}]
  %s6 = inlined_call_operand.vmem [shape: f32[1,32], index: 6, kind: input, shape index: {}]
  %s7 = inlined_call_operand.vmem [shape: bf16[32,128], index: 7, kind: input, shape index: {}]
  %s8 = inlined_call_operand.vmem [shape: f32[1,128], index: 8, kind: input, shape index: {}]
  %s9 = inlined_call_operand.vmem [shape: f32[1,128], index: 9, kind: input, shape index: {}]
  %s10 = inlined_call_operand.vmem [shape: f32[1,128], index: 10, kind: input, shape index: {}]
  %s11 = inlined_call_operand.vmem [shape: f32[40,128], index: 11, kind: output, shape index: {}, may-alias: {2,11}]
  %s12 = sld [smem:[#allocation0]]
  $region54: #{_lambda_.9} parent=0
    _
  %s14 = ssub.s32 1, %s12
  %s15 = scalar_select 0, %s14, %s12
  // Predicated region
  $region2: #{_lambda_.9} parent=0 // pred_check
    _
  $region3: #{_lambda_.9} parent=0 // pred_check_branch
    %17 = sbr.rel (0) target = $region5
  $region4: #{_lambda_.9} parent=0 // pred_region
    _
  $region5: #{_lambda_.9} parent=0 // pred_fallthru
    _
  // Predicated region
  $region6: #{_lambda_.9} parent=0 // pred_check
    _
  $region7: #{_lambda_.9} parent=0 // pred_check_branch
    %19 = sbr.rel (0) target = $region9
  $region8: #{_lambda_.9} parent=0 // pred_region
    _
  $region9: #{_lambda_.9} parent=0 // pred_fallthru
    _
  // Predicated region
  $region10: #{_lambda_.9} parent=0 // pred_check
    _
  $region11: #{_lambda_.9} parent=0 // pred_check_branch
    %21 = sbr.rel (0) target = $region13
  $region12: #{_lambda_.9} parent=0 // pred_region
    _
  $region13: #{_lambda_.9} parent=0 // pred_fallthru
    _
  // Predicated region
  $region14: #{_lambda_.9} parent=0 // pred_check
    _
  $region15: #{_lambda_.9} parent=0 // pred_check_branch
    %23 = sbr.rel (0) target = $region17
  $region16: #{_lambda_.9} parent=0 // pred_region
    _
  $region17: #{_lambda_.9} parent=0 // pred_fallthru
    _
  // Predicated region
  $region18: #{_lambda_.9} parent=0 // pred_check
    _
  $region19: #{_lambda_.9} parent=0 // pred_check_branch
    %25 = sbr.rel (0) target = $region21
  $region20: #{_lambda_.9} parent=0 // pred_region
    _
  $region21: #{_lambda_.9} parent=0 // pred_fallthru
    _
  // Predicated region
  $region22: #{_lambda_.9} parent=0 // pred_check
    _
  $region23: #{_lambda_.9} parent=0 // pred_check_branch
    %27 = sbr.rel (0) target = $region25
  $region24: #{_lambda_.9} parent=0 // pred_region
    _
  $region25: #{_lambda_.9} parent=0 // pred_fallthru
    _
  // Predicated region
  $region26: #{_lambda_.9} parent=0 // pred_check
    _
  $region27: #{_lambda_.9} parent=0 // pred_check_branch
    %29 = sbr.rel (0) target = $region29
  $region28: #{_lambda_.9} parent=0 // pred_region
    _
  $region29: #{_lambda_.9} parent=0 // pred_fallthru
    _
  // Predicated region
  $region30: #{_lambda_.9} parent=0 // pred_check
    _
  $region31: #{_lambda_.9} parent=0 // pred_check_branch
    %31 = sbr.rel (0) target = $region33
  $region32: #{_lambda_.9} parent=0 // pred_region
    _
  $region33: #{_lambda_.9} parent=0 // pred_fallthru
    _
  // Predicated region
  $region34: #{_lambda_.9} parent=0 // pred_check
    _
  $region35: #{_lambda_.9} parent=0 // pred_check_branch
    %33 = sbr.rel (0) target = $region37
  $region36: #{_lambda_.9} parent=0 // pred_region
    _
  $region37: #{_lambda_.9} parent=0 // pred_fallthru
    _
  // Predicated region
  $region38: #{_lambda_.9} parent=0 // pred_check
    _
  $region39: #{_lambda_.9} parent=0 // pred_check_branch
    %35 = sbr.rel (0) target = $region41
  $region40: #{_lambda_.9} parent=0 // pred_region
    _
  $region41: #{_lambda_.9} parent=0 // pred_fallthru
    _
  // Predicated region
  $region42: #{_lambda_.9} parent=0 // pred_check
    _
  $region43: #{_lambda_.9} parent=0 // pred_check_branch
    %37 = sbr.rel (0) target = $region45
  $region44: #{_lambda_.9} parent=0 // pred_region
    _
  $region45: #{_lambda_.9} parent=0 // pred_fallthru
    _
  %v39 = vld [vmem:[%s0] sm:$0xff]
  %v40 = vld [vmem:[%s0 + $0x8] sm:$0xff]
  %v41 = vld [vmem:[%s0 + $0x10] sm:$0xff]
  %v42 = vld [vmem:[%s0 + $0x18] sm:$0xff]
  %v43 = vld [vmem:[%s0 + $0x20] sm:$0xff]
  %v44 = vpack.c.bf16 %v40, %v39
  %v45 = vpack.c.bf16 %v42, %v41
  %v46 = vpack.c.bf16 %v43, %v43
  %v47 = vld [vmem:[%s3] sm:$0xf]
  %v48 = vld [vmem:[%s3 + $0x4] sm:$0xf]
  %v49 = vld [vmem:[%s3 + $0x8] sm:$0xf]
  %v50 = vld [vmem:[%s3 + $0xc] sm:$0xf]
  %v51 = vld [vmem:[%s3 + $0x10] sm:$0xf]
  %v52 = vld [vmem:[%s3 + $0x14] sm:$0xf]
  %v53 = vld [vmem:[%s3 + $0x18] sm:$0xf]
  %v54 = vld [vmem:[%s3 + $0x1c] sm:$0xf]
  %v55 = vld [vmem:[%s3 + $0x20] sm:$0xf]
  %v56 = vld [vmem:[%s3 + $0x24] sm:$0xf]
  %v57 = vld [vmem:[%s3 + $0x28] sm:$0xf]
  %v58 = vld [vmem:[%s3 + $0x2c] sm:$0xf]
  %v59 = vld [vmem:[%s3 + $0x30] sm:$0xf]
  %v60 = vld [vmem:[%s3 + $0x34] sm:$0xf]
  %v61 = vld [vmem:[%s3 + $0x38] sm:$0xf]
  %v62 = vld [vmem:[%s3 + $0x3c] sm:$0xf]
  %v63 = vld [vmem:[%s1] sm:$0xff]
  %v64 = vld [vmem:[%s1 + $0x8] sm:$0xff]
  %v65 = vld [vmem:[%s1 + $0x10] sm:$0xff]
  %v66 = vld [vmem:[%s1 + $0x18] sm:$0xff]
  %v67 = vld [vmem:[%s1 + $0x20] sm:$0xff]
  %v68 = vpack.c.bf16 %v64, %v63
  %v69 = vpack.c.bf16 %v66, %v65
  %v70 = vpack.c.bf16 %v67, %v67
  %v71 = vld [vmem:[%s4] sm:$0xf]
  %v72 = vld [vmem:[%s4 + $0x4] sm:$0xf]
  %v73 = vld [vmem:[%s4 + $0x8] sm:$0xf]
  %v74 = vld [vmem:[%s4 + $0xc] sm:$0xf]
  %v75 = vld [vmem:[%s4 + $0x10] sm:$0xf]
  %v76 = vld [vmem:[%s4 + $0x14] sm:$0xf]
  %v77 = vld [vmem:[%s4 + $0x18] sm:$0xf]
  %v78 = vld [vmem:[%s4 + $0x1c] sm:$0xf]
  %v79 = vld [vmem:[%s4 + $0x20] sm:$0xf]
  %v80 = vld [vmem:[%s4 + $0x24] sm:$0xf]
  %v81 = vld [vmem:[%s4 + $0x28] sm:$0xf]
  %v82 = vld [vmem:[%s4 + $0x2c] sm:$0xf]
  %v83 = vld [vmem:[%s4 + $0x30] sm:$0xf]
  %v84 = vld [vmem:[%s4 + $0x34] sm:$0xf]
  %v85 = vld [vmem:[%s4 + $0x38] sm:$0xf]
  %v86 = vld [vmem:[%s4 + $0x3c] sm:$0xf]
  %v103 = vunpack.c.l.b16 %v71
  %v104 = vunpack.c.l.b16 %v72
  %v105 = vunpack.c.l.b16 %v73
  %v106 = vunpack.c.l.b16 %v74
  %v107 = vunpack.c.l.b16 %v75
  %v108 = vunpack.c.l.b16 %v76
  %v109 = vunpack.c.l.b16 %v77
  %v110 = vunpack.c.l.b16 %v78
  %v111 = vunpack.c.l.b16 %v79
  %v112 = vunpack.c.l.b16 %v80
  %v113 = vunpack.c.l.b16 %v81
  %v114 = vunpack.c.l.b16 %v82
  %v115 = vunpack.c.l.b16 %v83
  %v116 = vunpack.c.l.b16 %v84
  %v117 = vunpack.c.l.b16 %v85
  %v118 = vunpack.c.l.b16 %v86
  %v119 = vpack.c.b16 %v104, %v103
  %v120 = vpack.c.b16 %v106, %v105
  %v121 = vpack.c.b16 %v108, %v107
  %v122 = vpack.c.b16 %v110, %v109
  %v123 = vpack.c.b16 %v112, %v111
  %v124 = vpack.c.b16 %v114, %v113
  %v125 = vpack.c.b16 %v116, %v115
  %v126 = vpack.c.b16 %v118, %v117
  %135 = vmatpush.bf16.msra.mxu0 %v126
  %136 = vmatpush.bf16.msra.mxu0 %v125
  %137 = vmatpush.bf16.msra.mxu0 %v124
  %138 = vmatpush.bf16.msra.mxu0 %v123
  %139 = vmatpush.bf16.msra.mxu0 %v122
  %140 = vmatpush.bf16.msra.mxu0 %v121
  %141 = vmatpush.bf16.msra.mxu0 %v120
  %142 = vmatpush.bf16.msra.mxu0 %v119
  %143 = vmatmul.bf16.gmra.mxu0 %v68
  %v144 = vpop.f32.mrf.mxu0
  %v145 = vadd.f32 0.0, %v144
  %v146 = vpop.f32.mrf.mxu0
  %v147 = vadd.f32 0.0, %v146
  %148 = vmatmul.bf16.gmra.mxu0 %v69
  %v149 = vpop.f32.mrf.mxu0
  %v150 = vadd.f32 0.0, %v149
  %v151 = vpop.f32.mrf.mxu0
  %v152 = vadd.f32 0.0, %v151
  %153 = vmatmul.bf16.gmra.mxu0 %v70
  %v154 = vpop.f32.mrf.mxu0
  %v155 = vadd.f32 0.0, %v154
  %v156 = vpop.f32.mrf.mxu0
  %157 = vdwg.mxu0
  %v174 = vunpack.c.l.b16 %v47
  %v175 = vunpack.c.l.b16 %v48
  %v176 = vunpack.c.l.b16 %v49
  %v177 = vunpack.c.l.b16 %v50
  %v178 = vunpack.c.l.b16 %v51
  %v179 = vunpack.c.l.b16 %v52
  %v180 = vunpack.c.l.b16 %v53
  %v181 = vunpack.c.l.b16 %v54
  %v182 = vunpack.c.l.b16 %v55
  %v183 = vunpack.c.l.b16 %v56
  %v184 = vunpack.c.l.b16 %v57
  %v185 = vunpack.c.l.b16 %v58
  %v186 = vunpack.c.l.b16 %v59
  %v187 = vunpack.c.l.b16 %v60
  %v188 = vunpack.c.l.b16 %v61
  %v189 = vunpack.c.l.b16 %v62
  %v190 = vpack.c.b16 %v175, %v174
  %v191 = vpack.c.b16 %v177, %v176
  %v192 = vpack.c.b16 %v179, %v178
  %v193 = vpack.c.b16 %v181, %v180
  %v194 = vpack.c.b16 %v183, %v182
  %v195 = vpack.c.b16 %v185, %v184
  %v196 = vpack.c.b16 %v187, %v186
  %v197 = vpack.c.b16 %v189, %v188
  %206 = vmatpush.bf16.msra.mxu0 %v197
  %207 = vmatpush.bf16.msra.mxu0 %v196
  %208 = vmatpush.bf16.msra.mxu0 %v195
  %209 = vmatpush.bf16.msra.mxu0 %v194
  %210 = vmatpush.bf16.msra.mxu0 %v193
  %211 = vmatpush.bf16.msra.mxu0 %v192
  %212 = vmatpush.bf16.msra.mxu0 %v191
  %213 = vmatpush.bf16.msra.mxu0 %v190
  %214 = vmatmul.bf16.gmra.mxu0 %v44
  %v215 = vpop.f32.mrf.mxu0
  %v216 = vadd.f32 %v145, %v215
  %v217 = vpop.f32.mrf.mxu0
  %v218 = vadd.f32 %v147, %v217
  %219 = vmatmul.bf16.gmra.mxu0 %v45
  %v220 = vpop.f32.mrf.mxu0
  %v221 = vadd.f32 %v150, %v220
  %v222 = vpop.f32.mrf.mxu0
  %v223 = vadd.f32 %v152, %v222
  %224 = vmatmul.bf16.gmra.mxu0 %v46
  %v225 = vpop.f32.mrf.mxu0
  %v226 = vadd.f32 %v155, %v225
  %v227 = vpop.f32.mrf.mxu0
  %228 = vdwg.mxu0
  %v229 = vld [vmem:[%s2] sm:$0xff]
  %v230 = vld [vmem:[%s2 + $0x8] sm:$0xff]
  %v231 = vld [vmem:[%s2 + $0x10] sm:$0xff]
  %v232 = vld [vmem:[%s2 + $0x18] sm:$0xff]
  %v233 = vld [vmem:[%s2 + $0x20] sm:$0xff]
  %v234 = vpack.c.bf16 %v230, %v229
  %v235 = vpack.c.bf16 %v232, %v231
  %v236 = vpack.c.bf16 %v233, %v233
  %v237 = vld [vmem:[%s5] sm:$0xf]
  %v238 = vld [vmem:[%s5 + $0x4] sm:$0xf]
  %v239 = vld [vmem:[%s5 + $0x8] sm:$0xf]
  %v240 = vld [vmem:[%s5 + $0xc] sm:$0xf]
  %v241 = vld [vmem:[%s5 + $0x10] sm:$0xf]
  %v242 = vld [vmem:[%s5 + $0x14] sm:$0xf]
  %v243 = vld [vmem:[%s5 + $0x18] sm:$0xf]
  %v244 = vld [vmem:[%s5 + $0x1c] sm:$0xf]
  %v245 = vld [vmem:[%s5 + $0x20] sm:$0xf]
  %v246 = vld [vmem:[%s5 + $0x24] sm:$0xf]
  %v247 = vld [vmem:[%s5 + $0x28] sm:$0xf]
  %v248 = vld [vmem:[%s5 + $0x2c] sm:$0xf]
  %v249 = vld [vmem:[%s5 + $0x30] sm:$0xf]
  %v250 = vld [vmem:[%s5 + $0x34] sm:$0xf]
  %v251 = vld [vmem:[%s5 + $0x38] sm:$0xf]
  %v252 = vld [vmem:[%s5 + $0x3c] sm:$0xf]
  %v269 = vunpack.c.l.b16 %v237
  %v270 = vunpack.c.l.b16 %v238
  %v271 = vunpack.c.l.b16 %v239
  %v272 = vunpack.c.l.b16 %v240
  %v273 = vunpack.c.l.b16 %v241
  %v274 = vunpack.c.l.b16 %v242
  %v275 = vunpack.c.l.b16 %v243
  %v276 = vunpack.c.l.b16 %v244
  %v277 = vunpack.c.l.b16 %v245
  %v278 = vunpack.c.l.b16 %v246
  %v279 = vunpack.c.l.b16 %v247
  %v280 = vunpack.c.l.b16 %v248
  %v281 = vunpack.c.l.b16 %v249
  %v282 = vunpack.c.l.b16 %v250
  %v283 = vunpack.c.l.b16 %v251
  %v284 = vunpack.c.l.b16 %v252
  %v285 = vpack.c.b16 %v270, %v269
  %v286 = vpack.c.b16 %v272, %v271
  %v287 = vpack.c.b16 %v274, %v273
  %v288 = vpack.c.b16 %v276, %v275
  %v289 = vpack.c.b16 %v278, %v277
  %v290 = vpack.c.b16 %v280, %v279
  %v291 = vpack.c.b16 %v282, %v281
  %v292 = vpack.c.b16 %v284, %v283
  %301 = vmatpush.bf16.msra.mxu0 %v292
  %302 = vmatpush.bf16.msra.mxu0 %v291
  %303 = vmatpush.bf16.msra.mxu0 %v290
  %304 = vmatpush.bf16.msra.mxu0 %v289
  %305 = vmatpush.bf16.msra.mxu0 %v288
  %306 = vmatpush.bf16.msra.mxu0 %v287
  %307 = vmatpush.bf16.msra.mxu0 %v286
  %308 = vmatpush.bf16.msra.mxu0 %v285
  %309 = vmatmul.bf16.gmra.mxu0 %v234
  %v310 = vpop.f32.mrf.mxu0
  %v311 = vadd.f32 0.0, %v310
  %v312 = vpop.f32.mrf.mxu0
  %v313 = vadd.f32 0.0, %v312
  %314 = vmatmul.bf16.gmra.mxu0 %v235
  %v315 = vpop.f32.mrf.mxu0
  %v316 = vadd.f32 0.0, %v315
  %v317 = vpop.f32.mrf.mxu0
  %v318 = vadd.f32 0.0, %v317
  %319 = vmatmul.bf16.gmra.mxu0 %v236
  %v320 = vpop.f32.mrf.mxu0
  %v321 = vadd.f32 0.0, %v320
  %v322 = vpop.f32.mrf.mxu0
  %323 = vdwg.mxu0
  %v324 = vadd.f32 %v216, %v311
  %v325 = vadd.f32 %v218, %v313
  %v326 = vadd.f32 %v221, %v316
  %v327 = vadd.f32 %v223, %v318
  %v328 = vadd.f32 %v226, %v321
  %v329 = vld [vmem:[%s6] sm:$0x1]
  %v331 = vperm.slane %v329, 0
  %v333 = vadd.f32 %v324, %v331
  %v334 = vadd.f32 %v325, %v331
  %v335 = vadd.f32 %v326, %v331
  %v336 = vadd.f32 %v327, %v331
  %v337 = vadd.f32 %v328, %v331
  %v338 = vmax.f32 %v333, 0.0
  %v339 = vmax.f32 %v334, 0.0
  %v340 = vmax.f32 %v335, 0.0
  %v341 = vmax.f32 %v336, 0.0
  %v342 = vmax.f32 %v337, 0.0
  %v343 = vpack.c.bf16 %v339, %v338
  %v344 = vpack.c.bf16 %v341, %v340
  %v345 = vpack.c.bf16 %v342, %v342
  %v346 = vld [vmem:[%s7] sm:$0xf]
  %v347 = vld [vmem:[%s7 + $0x4] sm:$0xf]
  %v348 = vld [vmem:[%s7 + $0x8] sm:$0xf]
  %v349 = vld [vmem:[%s7 + $0xc] sm:$0xf]
  %v350 = vld [vmem:[%s8] sm:$0x1]
  %v352 = vperm.slane %v350, 0
  %v358 = vunpack.c.l.b16 %v346
  %v359 = vunpack.c.l.b16 %v347
  %v360 = vunpack.c.l.b16 %v348
  %v361 = vunpack.c.l.b16 %v349
  %v362 = vpack.c.b16 %v359, %v358
  %v363 = vpack.c.b16 %v361, %v360
  %vm366 = vcmask 261120
  %v368 = vsel %vm366, %v343, 0
  %v371 = vsel %vm366, %v344, 0
  %v374 = vsel %vm366, %v345, 0
  %376 = vmatpush.bf16.msra.mxu0 0
  %377 = vmatpush.bf16.msra.mxu0 0
  %378 = vmatpush.bf16.msra.mxu0 0
  %379 = vmatpush.bf16.msra.mxu0 0
  %380 = vmatpush.bf16.msra.mxu0 0
  %381 = vmatpush.bf16.msra.mxu0 0
  %382 = vmatpush.bf16.msra.mxu0 %v363
  %383 = vmatpush.bf16.msra.mxu0 %v362
  %384 = vmatmul.bf16.gmra.mxu0 %v368
  %v385 = vpop.f32.mrf.mxu0
  %v386 = vadd.f32 %v352, %v385
  %v387 = vpop.f32.mrf.mxu0
  %v388 = vadd.f32 %v352, %v387
  %389 = vmatmul.bf16.gmra.mxu0 %v371
  %v390 = vpop.f32.mrf.mxu0
  %v391 = vadd.f32 %v352, %v390
  %v392 = vpop.f32.mrf.mxu0
  %v393 = vadd.f32 %v352, %v392
  %394 = vmatmul.bf16.gmra.mxu0 %v374
  %v395 = vpop.f32.mrf.mxu0
  %v396 = vadd.f32 %v352, %v395
  %v397 = vpop.f32.mrf.mxu0
  %398 = vdwg.mxu0
  %v399 = vlaneseq
  %v400 = vand.u32 %v399, 127
  %vm401 = vcmp.lt.s32.totalorder %v400, 32
  %v402 = vsel %vm401, 1, 0
  %v403 = vcvt.s32.f32 %v402
  %v404 = vmul.f32 %v386, %v403
  %v405 = vmul.f32 %v388, %v403
  %v406 = vmul.f32 %v391, %v403
  %v407 = vmul.f32 %v393, %v403
  %v408 = vmul.f32 %v396, %v403
  %409 = vadd.xlane.f32.xlu0 %v404
  %v410 = vpop.xlane.xlu0 %409
  %411 = vadd.xlane.f32.xlu0 %v405
  %v412 = vpop.xlane.xlu0 %411
  %413 = vadd.xlane.f32.xlu0 %v406
  %v414 = vpop.xlane.xlu0 %413
  %415 = vadd.xlane.f32.xlu0 %v407
  %v416 = vpop.xlane.xlu0 %415
  %417 = vadd.xlane.f32.xlu0 %v408
  %v418 = vpop.xlane.xlu0 %417
  %v419 = vmul.f32 %v410, 0.03125
  %v420 = vmul.f32 %v412, 0.03125
  %v421 = vmul.f32 %v414, 0.03125
  %v422 = vmul.f32 %v416, 0.03125
  %v423 = vmul.f32 %v418, 0.03125
  %v424 = vsub.f32 %v386, %v419
  %v425 = vsub.f32 %v388, %v420
  %v426 = vsub.f32 %v391, %v421
  %v427 = vsub.f32 %v393, %v422
  %v428 = vsub.f32 %v396, %v423
  %v429 = vmul.f32 %v424, %v403
  %v430 = vmul.f32 %v425, %v403
  %v431 = vmul.f32 %v426, %v403
  %v432 = vmul.f32 %v427, %v403
  %v433 = vmul.f32 %v428, %v403
  %v434 = vmul.f32 %v429, %v429
  %v435 = vmul.f32 %v430, %v430
  %v436 = vmul.f32 %v431, %v431
  %v437 = vmul.f32 %v432, %v432
  %v438 = vmul.f32 %v433, %v433
  %439 = vadd.xlane.f32.xlu0 %v434
  %v440 = vpop.xlane.xlu0 %439
  %441 = vadd.xlane.f32.xlu0 %v435
  %v442 = vpop.xlane.xlu0 %441
  %443 = vadd.xlane.f32.xlu0 %v436
  %v444 = vpop.xlane.xlu0 %443
  %445 = vadd.xlane.f32.xlu0 %v437
  %v446 = vpop.xlane.xlu0 %445
  %447 = vadd.xlane.f32.xlu0 %v438
  %v448 = vpop.xlane.xlu0 %447
  %v449 = vmul.f32 %v440, 0.03125
  %v450 = vmul.f32 %v442, 0.03125
  %v451 = vmul.f32 %v444, 0.03125
  %v452 = vmul.f32 %v446, 0.03125
  %v453 = vmul.f32 %v448, 0.03125
  %v454 = vadd.f32 %v449, 1e-05
  %v455 = vadd.f32 %v450, 1e-05
  %v456 = vadd.f32 %v451, 1e-05
  %v457 = vadd.f32 %v452, 1e-05
  %v458 = vadd.f32 %v453, 1e-05
  %v459 = vrsqrt.pop %v454
  %v460 = vmul.f32 %v459, %v454
  %v461 = vmul.f32 %v460, %v459
  %v462 = vmul.f32 0.5, %v461
  %v463 = vsub.f32 1.5, %v462
  %v464 = vmul.f32 %v459, %v463
  %vm465 = vweird.f32 %v454
  %vm466 = vweird.f32 %v459
  %vm467 = vmor %vm465, %vm466
  %v468 = vsel %vm467, %v459, %v464
  %v469 = vrsqrt.pop %v455
  %v470 = vmul.f32 %v469, %v455
  %v471 = vmul.f32 %v470, %v469
  %v472 = vmul.f32 0.5, %v471
  %v473 = vsub.f32 1.5, %v472
  %v474 = vmul.f32 %v469, %v473
  %vm475 = vweird.f32 %v455
  %vm476 = vweird.f32 %v469
  %vm477 = vmor %vm475, %vm476
  %v478 = vsel %vm477, %v469, %v474
  %v479 = vrsqrt.pop %v456
  %v480 = vmul.f32 %v479, %v456
  %v481 = vmul.f32 %v480, %v479
  %v482 = vmul.f32 0.5, %v481
  %v483 = vsub.f32 1.5, %v482
  %v484 = vmul.f32 %v479, %v483
  %vm485 = vweird.f32 %v456
  %vm486 = vweird.f32 %v479
  %vm487 = vmor %vm485, %vm486
  %v488 = vsel %vm487, %v479, %v484
  %v489 = vrsqrt.pop %v457
  %v490 = vmul.f32 %v489, %v457
  %v491 = vmul.f32 %v490, %v489
  %v492 = vmul.f32 0.5, %v491
  %v493 = vsub.f32 1.5, %v492
  %v494 = vmul.f32 %v489, %v493
  %vm495 = vweird.f32 %v457
  %vm496 = vweird.f32 %v489
  %vm497 = vmor %vm495, %vm496
  %v498 = vsel %vm497, %v489, %v494
  %v499 = vrsqrt.pop %v458
  %v500 = vmul.f32 %v499, %v458
  %v501 = vmul.f32 %v500, %v499
  %v502 = vmul.f32 0.5, %v501
  %v503 = vsub.f32 1.5, %v502
  %v504 = vmul.f32 %v499, %v503
  %vm505 = vweird.f32 %v458
  %vm506 = vweird.f32 %v499
  %vm507 = vmor %vm505, %vm506
  %v508 = vsel %vm507, %v499, %v504
  %v509 = vmul.f32 %v429, %v468
  %v510 = vmul.f32 %v430, %v478
  %v511 = vmul.f32 %v431, %v488
  %v512 = vmul.f32 %v432, %v498
  %v513 = vmul.f32 %v433, %v508
  %v514 = vld [vmem:[%s9] sm:$0x1]
  %v516 = vperm.slane %v514, 0
  %v518 = vmul.f32 %v509, %v516
  %v519 = vmul.f32 %v510, %v516
  %v520 = vmul.f32 %v511, %v516
  %v521 = vmul.f32 %v512, %v516
  %v522 = vmul.f32 %v513, %v516
  %v523 = vld [vmem:[%s10] sm:$0x1]
  %v525 = vperm.slane %v523, 0
  %v527 = vadd.f32 %v518, %v525
  %v528 = vadd.f32 %v519, %v525
  %v529 = vadd.f32 %v520, %v525
  %v530 = vadd.f32 %v521, %v525
  %v531 = vadd.f32 %v522, %v525
  %v532 = vadd.f32 %v527, %v229
  %v533 = vadd.f32 %v528, %v230
  %v534 = vadd.f32 %v529, %v231
  %v535 = vadd.f32 %v530, %v232
  %v536 = vadd.f32 %v531, %v233
  %537 = vst [vmem:[%s11] sm:$0xff] %v532
  %538 = vst [vmem:[%s11 + $0x8] sm:$0xff] %v533
  %539 = vst [vmem:[%s11 + $0x10] sm:$0xff] %v534
  %540 = vst [vmem:[%s11 + $0x18] sm:$0xff] %v535
  %541 = vst [vmem:[%s11 + $0x20] sm:$0xff] %v536
  // Predicated region
  $region46: #{_lambda_.9} parent=0 // pred_check
    _
  $region47: #{_lambda_.9} parent=0 // pred_check_branch
    %543 = sbr.rel (0) target = $region49
  $region48: #{_lambda_.9} parent=0 // pred_region
    _
  $region49: #{_lambda_.9} parent=0 // pred_fallthru
    _
  // Predicated region
  $region50: #{_lambda_.9} parent=0 // pred_check
    _
  $region51: #{_lambda_.9} parent=0 // pred_check_branch
    %545 = sbr.rel (0) target = $region53
  $region52: #{_lambda_.9} parent=0 // pred_region
    _
  $region53: #{_lambda_.9} parent=0 // pred_fallthru
    _

// kernel: _lambda_.10
$region0: #{_lambda_.10}
  #allocation0 [shape = 'u32[]', space=smem, size = 0x4, offset = 0x4, fixed_abs, tag = 'smem constant byte address 0x4 - core index']
  #allocation1 [shape = 'u32[72,128]{1,0:T(1,128)}', space=vmem, size = 0x9000, scoped, tag = 'internal scratch']
  %s0 = inlined_call_operand.vmem [shape: f32[16,128], index: 0, kind: input, shape index: {}, may-alias: {0,9}]
  %s1 = inlined_call_operand.vmem [shape: f32[16,128], index: 1, kind: input, shape index: {}]
  %s2 = inlined_call_operand.vmem [shape: bf16[128,32], index: 2, kind: input, shape index: {}]
  %s3 = inlined_call_operand.vmem [shape: bf16[128,32], index: 3, kind: input, shape index: {}]
  %s4 = inlined_call_operand.vmem [shape: f32[1,32], index: 4, kind: input, shape index: {}]
  %s5 = inlined_call_operand.vmem [shape: bf16[32,128], index: 5, kind: input, shape index: {}]
  %s6 = inlined_call_operand.vmem [shape: f32[1,128], index: 6, kind: input, shape index: {}]
  %s7 = inlined_call_operand.vmem [shape: f32[1,128], index: 7, kind: input, shape index: {}]
  %s8 = inlined_call_operand.vmem [shape: f32[1,128], index: 8, kind: input, shape index: {}]
  %s9 = inlined_call_operand.vmem [shape: f32[16,128], index: 9, kind: output, shape index: {}, may-alias: {0,9}]
  %s10 = sld [smem:[#allocation0]]
  $region46: #{_lambda_.10} parent=0
    _
  %s12 = ssub.s32 1, %s10
  %s13 = scalar_select 0, %s12, %s10
  // Predicated region
  $region2: #{_lambda_.10} parent=0 // pred_check
    _
  $region3: #{_lambda_.10} parent=0 // pred_check_branch
    %15 = sbr.rel (0) target = $region5
  $region4: #{_lambda_.10} parent=0 // pred_region
    _
  $region5: #{_lambda_.10} parent=0 // pred_fallthru
    _
  // Predicated region
  $region6: #{_lambda_.10} parent=0 // pred_check
    _
  $region7: #{_lambda_.10} parent=0 // pred_check_branch
    %17 = sbr.rel (0) target = $region9
  $region8: #{_lambda_.10} parent=0 // pred_region
    _
  $region9: #{_lambda_.10} parent=0 // pred_fallthru
    _
  // Predicated region
  $region10: #{_lambda_.10} parent=0 // pred_check
    _
  $region11: #{_lambda_.10} parent=0 // pred_check_branch
    %19 = sbr.rel (0) target = $region13
  $region12: #{_lambda_.10} parent=0 // pred_region
    _
  $region13: #{_lambda_.10} parent=0 // pred_fallthru
    _
  // Predicated region
  $region14: #{_lambda_.10} parent=0 // pred_check
    _
  $region15: #{_lambda_.10} parent=0 // pred_check_branch
    %21 = sbr.rel (0) target = $region17
  $region16: #{_lambda_.10} parent=0 // pred_region
    _
  $region17: #{_lambda_.10} parent=0 // pred_fallthru
    _
  // Predicated region
  $region18: #{_lambda_.10} parent=0 // pred_check
    _
  $region19: #{_lambda_.10} parent=0 // pred_check_branch
    %23 = sbr.rel (0) target = $region21
  $region20: #{_lambda_.10} parent=0 // pred_region
    _
  $region21: #{_lambda_.10} parent=0 // pred_fallthru
    _
  // Predicated region
  $region22: #{_lambda_.10} parent=0 // pred_check
    _
  $region23: #{_lambda_.10} parent=0 // pred_check_branch
    %25 = sbr.rel (0) target = $region25
  $region24: #{_lambda_.10} parent=0 // pred_region
    _
  $region25: #{_lambda_.10} parent=0 // pred_fallthru
    _
  // Predicated region
  $region26: #{_lambda_.10} parent=0 // pred_check
    _
  $region27: #{_lambda_.10} parent=0 // pred_check_branch
    %27 = sbr.rel (0) target = $region29
  $region28: #{_lambda_.10} parent=0 // pred_region
    _
  $region29: #{_lambda_.10} parent=0 // pred_fallthru
    _
  // Predicated region
  $region30: #{_lambda_.10} parent=0 // pred_check
    _
  $region31: #{_lambda_.10} parent=0 // pred_check_branch
    %29 = sbr.rel (0) target = $region33
  $region32: #{_lambda_.10} parent=0 // pred_region
    _
  $region33: #{_lambda_.10} parent=0 // pred_fallthru
    _
  // Predicated region
  $region34: #{_lambda_.10} parent=0 // pred_check
    _
  $region35: #{_lambda_.10} parent=0 // pred_check_branch
    %31 = sbr.rel (0) target = $region37
  $region36: #{_lambda_.10} parent=0 // pred_region
    _
  $region37: #{_lambda_.10} parent=0 // pred_fallthru
    _
  %v33 = vld [vmem:[%s0] sm:$0xff]
  %v34 = vld [vmem:[%s0 + $0x8] sm:$0xff]
  %v35 = vpack.c.bf16 %v34, %v33
  %v36 = vld [vmem:[%s2] sm:$0xf]
  %v37 = vld [vmem:[%s2 + $0x4] sm:$0xf]
  %v38 = vld [vmem:[%s2 + $0x8] sm:$0xf]
  %v39 = vld [vmem:[%s2 + $0xc] sm:$0xf]
  %v40 = vld [vmem:[%s2 + $0x10] sm:$0xf]
  %v41 = vld [vmem:[%s2 + $0x14] sm:$0xf]
  %v42 = vld [vmem:[%s2 + $0x18] sm:$0xf]
  %v43 = vld [vmem:[%s2 + $0x1c] sm:$0xf]
  %v44 = vld [vmem:[%s2 + $0x20] sm:$0xf]
  %v45 = vld [vmem:[%s2 + $0x24] sm:$0xf]
  %v46 = vld [vmem:[%s2 + $0x28] sm:$0xf]
  %v47 = vld [vmem:[%s2 + $0x2c] sm:$0xf]
  %v48 = vld [vmem:[%s2 + $0x30] sm:$0xf]
  %v49 = vld [vmem:[%s2 + $0x34] sm:$0xf]
  %v50 = vld [vmem:[%s2 + $0x38] sm:$0xf]
  %v51 = vld [vmem:[%s2 + $0x3c] sm:$0xf]
  %v52 = vld [vmem:[%s1] sm:$0xff]
  %v53 = vld [vmem:[%s1 + $0x8] sm:$0xff]
  %v54 = vpack.c.bf16 %v53, %v52
  %v55 = vld [vmem:[%s3] sm:$0xf]
  %v56 = vld [vmem:[%s3 + $0x4] sm:$0xf]
  %v57 = vld [vmem:[%s3 + $0x8] sm:$0xf]
  %v58 = vld [vmem:[%s3 + $0xc] sm:$0xf]
  %v59 = vld [vmem:[%s3 + $0x10] sm:$0xf]
  %v60 = vld [vmem:[%s3 + $0x14] sm:$0xf]
  %v61 = vld [vmem:[%s3 + $0x18] sm:$0xf]
  %v62 = vld [vmem:[%s3 + $0x1c] sm:$0xf]
  %v63 = vld [vmem:[%s3 + $0x20] sm:$0xf]
  %v64 = vld [vmem:[%s3 + $0x24] sm:$0xf]
  %v65 = vld [vmem:[%s3 + $0x28] sm:$0xf]
  %v66 = vld [vmem:[%s3 + $0x2c] sm:$0xf]
  %v67 = vld [vmem:[%s3 + $0x30] sm:$0xf]
  %v68 = vld [vmem:[%s3 + $0x34] sm:$0xf]
  %v69 = vld [vmem:[%s3 + $0x38] sm:$0xf]
  %v70 = vld [vmem:[%s3 + $0x3c] sm:$0xf]
  %v87 = vunpack.c.l.b16 %v55
  %v88 = vunpack.c.l.b16 %v56
  %v89 = vunpack.c.l.b16 %v57
  %v90 = vunpack.c.l.b16 %v58
  %v91 = vunpack.c.l.b16 %v59
  %v92 = vunpack.c.l.b16 %v60
  %v93 = vunpack.c.l.b16 %v61
  %v94 = vunpack.c.l.b16 %v62
  %v95 = vunpack.c.l.b16 %v63
  %v96 = vunpack.c.l.b16 %v64
  %v97 = vunpack.c.l.b16 %v65
  %v98 = vunpack.c.l.b16 %v66
  %v99 = vunpack.c.l.b16 %v67
  %v100 = vunpack.c.l.b16 %v68
  %v101 = vunpack.c.l.b16 %v69
  %v102 = vunpack.c.l.b16 %v70
  %v103 = vpack.c.b16 %v88, %v87
  %v104 = vpack.c.b16 %v90, %v89
  %v105 = vpack.c.b16 %v92, %v91
  %v106 = vpack.c.b16 %v94, %v93
  %v107 = vpack.c.b16 %v96, %v95
  %v108 = vpack.c.b16 %v98, %v97
  %v109 = vpack.c.b16 %v100, %v99
  %v110 = vpack.c.b16 %v102, %v101
  %119 = vmatpush.bf16.msra.mxu0 %v110
  %120 = vmatpush.bf16.msra.mxu0 %v109
  %121 = vmatpush.bf16.msra.mxu0 %v108
  %122 = vmatpush.bf16.msra.mxu0 %v107
  %123 = vmatpush.bf16.msra.mxu0 %v106
  %124 = vmatpush.bf16.msra.mxu0 %v105
  %125 = vmatpush.bf16.msra.mxu0 %v104
  %126 = vmatpush.bf16.msra.mxu0 %v103
  %127 = vmatmul.bf16.gmra.mxu0 %v54
  %v128 = vpop.f32.mrf.mxu0
  %v129 = vadd.f32 0.0, %v128
  %v130 = vpop.f32.mrf.mxu0
  %v131 = vadd.f32 0.0, %v130
  %132 = vdwg.mxu0
  %v149 = vunpack.c.l.b16 %v36
  %v150 = vunpack.c.l.b16 %v37
  %v151 = vunpack.c.l.b16 %v38
  %v152 = vunpack.c.l.b16 %v39
  %v153 = vunpack.c.l.b16 %v40
  %v154 = vunpack.c.l.b16 %v41
  %v155 = vunpack.c.l.b16 %v42
  %v156 = vunpack.c.l.b16 %v43
  %v157 = vunpack.c.l.b16 %v44
  %v158 = vunpack.c.l.b16 %v45
  %v159 = vunpack.c.l.b16 %v46
  %v160 = vunpack.c.l.b16 %v47
  %v161 = vunpack.c.l.b16 %v48
  %v162 = vunpack.c.l.b16 %v49
  %v163 = vunpack.c.l.b16 %v50
  %v164 = vunpack.c.l.b16 %v51
  %v165 = vpack.c.b16 %v150, %v149
  %v166 = vpack.c.b16 %v152, %v151
  %v167 = vpack.c.b16 %v154, %v153
  %v168 = vpack.c.b16 %v156, %v155
  %v169 = vpack.c.b16 %v158, %v157
  %v170 = vpack.c.b16 %v160, %v159
  %v171 = vpack.c.b16 %v162, %v161
  %v172 = vpack.c.b16 %v164, %v163
  %181 = vmatpush.bf16.msra.mxu0 %v172
  %182 = vmatpush.bf16.msra.mxu0 %v171
  %183 = vmatpush.bf16.msra.mxu0 %v170
  %184 = vmatpush.bf16.msra.mxu0 %v169
  %185 = vmatpush.bf16.msra.mxu0 %v168
  %186 = vmatpush.bf16.msra.mxu0 %v167
  %187 = vmatpush.bf16.msra.mxu0 %v166
  %188 = vmatpush.bf16.msra.mxu0 %v165
  %189 = vmatmul.bf16.gmra.mxu0 %v35
  %v190 = vpop.f32.mrf.mxu0
  %v191 = vadd.f32 %v129, %v190
  %v192 = vpop.f32.mrf.mxu0
  %v193 = vadd.f32 %v131, %v192
  %194 = vdwg.mxu0
  %v195 = vld [vmem:[%s4] sm:$0x1]
  %v197 = vperm.slane %v195, 0
  %v199 = vadd.f32 %v191, %v197
  %v200 = vadd.f32 %v193, %v197
  %v201 = vmax.f32 %v199, 0.0
  %v202 = vmax.f32 %v200, 0.0
  %v203 = vpack.c.bf16 %v202, %v201
  %v204 = vld [vmem:[%s5] sm:$0xf]
  %v205 = vld [vmem:[%s5 + $0x4] sm:$0xf]
  %v206 = vld [vmem:[%s5 + $0x8] sm:$0xf]
  %v207 = vld [vmem:[%s5 + $0xc] sm:$0xf]
  %v208 = vld [vmem:[%s6] sm:$0x1]
  %v210 = vperm.slane %v208, 0
  %v216 = vunpack.c.l.b16 %v204
  %v217 = vunpack.c.l.b16 %v205
  %v218 = vunpack.c.l.b16 %v206
  %v219 = vunpack.c.l.b16 %v207
  %v220 = vpack.c.b16 %v217, %v216
  %v221 = vpack.c.b16 %v219, %v218
  %vm224 = vcmask 261120
  %v226 = vsel %vm224, %v203, 0
  %228 = vmatpush.bf16.msra.mxu0 0
  %229 = vmatpush.bf16.msra.mxu0 0
  %230 = vmatpush.bf16.msra.mxu0 0
  %231 = vmatpush.bf16.msra.mxu0 0
  %232 = vmatpush.bf16.msra.mxu0 0
  %233 = vmatpush.bf16.msra.mxu0 0
  %234 = vmatpush.bf16.msra.mxu0 %v221
  %235 = vmatpush.bf16.msra.mxu0 %v220
  %236 = vmatmul.bf16.gmra.mxu0 %v226
  %v237 = vpop.f32.mrf.mxu0
  %v238 = vadd.f32 %v210, %v237
  %v239 = vpop.f32.mrf.mxu0
  %v240 = vadd.f32 %v210, %v239
  %241 = vdwg.mxu0
  %v242 = vlaneseq
  %v243 = vand.u32 %v242, 127
  %vm244 = vcmp.lt.s32.totalorder %v243, 32
  %v245 = vsel %vm244, 1, 0
  %v246 = vcvt.s32.f32 %v245
  %v247 = vmul.f32 %v238, %v246
  %v248 = vmul.f32 %v240, %v246
  %249 = vadd.xlane.f32.xlu0 %v247
  %v250 = vpop.xlane.xlu0 %249
  %251 = vadd.xlane.f32.xlu0 %v248
  %v252 = vpop.xlane.xlu0 %251
  %v253 = vmul.f32 %v250, 0.03125
  %v254 = vmul.f32 %v252, 0.03125
  %v255 = vsub.f32 %v238, %v253
  %v256 = vsub.f32 %v240, %v254
  %v257 = vmul.f32 %v255, %v246
  %v258 = vmul.f32 %v256, %v246
  %v259 = vmul.f32 %v257, %v257
  %v260 = vmul.f32 %v258, %v258
  %261 = vadd.xlane.f32.xlu0 %v259
  %v262 = vpop.xlane.xlu0 %261
  %263 = vadd.xlane.f32.xlu0 %v260
  %v264 = vpop.xlane.xlu0 %263
  %v265 = vmul.f32 %v262, 0.03125
  %v266 = vmul.f32 %v264, 0.03125
  %v267 = vadd.f32 %v265, 1e-05
  %v268 = vadd.f32 %v266, 1e-05
  %v269 = vrsqrt.pop %v267
  %v270 = vmul.f32 %v269, %v267
  %v271 = vmul.f32 %v270, %v269
  %v272 = vmul.f32 0.5, %v271
  %v273 = vsub.f32 1.5, %v272
  %v274 = vmul.f32 %v269, %v273
  %vm275 = vweird.f32 %v267
  %vm276 = vweird.f32 %v269
  %vm277 = vmor %vm275, %vm276
  %v278 = vsel %vm277, %v269, %v274
  %v279 = vrsqrt.pop %v268
  %v280 = vmul.f32 %v279, %v268
  %v281 = vmul.f32 %v280, %v279
  %v282 = vmul.f32 0.5, %v281
  %v283 = vsub.f32 1.5, %v282
  %v284 = vmul.f32 %v279, %v283
  %vm285 = vweird.f32 %v268
  %vm286 = vweird.f32 %v279
  %vm287 = vmor %vm285, %vm286
  %v288 = vsel %vm287, %v279, %v284
  %v289 = vmul.f32 %v257, %v278
  %v290 = vmul.f32 %v258, %v288
  %v291 = vld [vmem:[%s7] sm:$0x1]
  %v293 = vperm.slane %v291, 0
  %v295 = vmul.f32 %v289, %v293
  %v296 = vmul.f32 %v290, %v293
  %v297 = vld [vmem:[%s8] sm:$0x1]
  %v299 = vperm.slane %v297, 0
  %v301 = vadd.f32 %v295, %v299
  %v302 = vadd.f32 %v296, %v299
  %v303 = vadd.f32 %v301, %v33
  %v304 = vadd.f32 %v302, %v34
  %305 = vst [vmem:[%s9] sm:$0xff] %v303
  %306 = vst [vmem:[%s9 + $0x8] sm:$0xff] %v304
  // Predicated region
  $region38: #{_lambda_.10} parent=0 // pred_check
    _
  $region39: #{_lambda_.10} parent=0 // pred_check_branch
    %308 = sbr.rel (0) target = $region41
  $region40: #{_lambda_.10} parent=0 // pred_region
    _
  $region41: #{_lambda_.10} parent=0 // pred_fallthru
    _
  // Predicated region
  $region42: #{_lambda_.10} parent=0 // pred_check
    _
  $region43: #{_lambda_.10} parent=0 // pred_check_branch
    %310 = sbr.rel (0) target = $region45
  $region44: #{_lambda_.10} parent=0 // pred_region
    _
  $region45: #{_lambda_.10} parent=0 // pred_fallthru
    _

// kernel: _lambda_.13
$region0: #{_lambda_.13}
  #allocation0 [shape = 'u32[]', space=smem, size = 0x4, offset = 0x4, fixed_abs, tag = 'smem constant byte address 0x4 - core index']
  #allocation1 [shape = 'u32[72,128]{1,0:T(1,128)}', space=vmem, size = 0x9000, scoped, tag = 'internal scratch']
  %s0 = inlined_call_operand.vmem [shape: f32[16,128], index: 0, kind: input, shape index: {}]
  %s1 = inlined_call_operand.vmem [shape: bf16[128,32], index: 1, kind: input, shape index: {}]
  %s2 = inlined_call_operand.vmem [shape: f32[1,32], index: 2, kind: input, shape index: {}]
  %s3 = inlined_call_operand.vmem [shape: bf16[32,128], index: 3, kind: input, shape index: {}]
  %s4 = inlined_call_operand.vmem [shape: f32[1,128], index: 4, kind: input, shape index: {}]
  %s5 = inlined_call_operand.vmem [shape: f32[16,128], index: 5, kind: output, shape index: {}]
  %s6 = sld [smem:[#allocation0]]
  $region30: #{_lambda_.13} parent=0
    _
  %s8 = ssub.s32 1, %s6
  %s9 = scalar_select 0, %s8, %s6
  // Predicated region
  $region2: #{_lambda_.13} parent=0 // pred_check
    _
  $region3: #{_lambda_.13} parent=0 // pred_check_branch
    %11 = sbr.rel (0) target = $region5
  $region4: #{_lambda_.13} parent=0 // pred_region
    _
  $region5: #{_lambda_.13} parent=0 // pred_fallthru
    _
  // Predicated region
  $region6: #{_lambda_.13} parent=0 // pred_check
    _
  $region7: #{_lambda_.13} parent=0 // pred_check_branch
    %13 = sbr.rel (0) target = $region9
  $region8: #{_lambda_.13} parent=0 // pred_region
    _
  $region9: #{_lambda_.13} parent=0 // pred_fallthru
    _
  // Predicated region
  $region10: #{_lambda_.13} parent=0 // pred_check
    _
  $region11: #{_lambda_.13} parent=0 // pred_check_branch
    %15 = sbr.rel (0) target = $region13
  $region12: #{_lambda_.13} parent=0 // pred_region
    _
  $region13: #{_lambda_.13} parent=0 // pred_fallthru
    _
  // Predicated region
  $region14: #{_lambda_.13} parent=0 // pred_check
    _
  $region15: #{_lambda_.13} parent=0 // pred_check_branch
    %17 = sbr.rel (0) target = $region17
  $region16: #{_lambda_.13} parent=0 // pred_region
    _
  $region17: #{_lambda_.13} parent=0 // pred_fallthru
    _
  // Predicated region
  $region18: #{_lambda_.13} parent=0 // pred_check
    _
  $region19: #{_lambda_.13} parent=0 // pred_check_branch
    %19 = sbr.rel (0) target = $region21
  $region20: #{_lambda_.13} parent=0 // pred_region
    _
  $region21: #{_lambda_.13} parent=0 // pred_fallthru
    _
  %v21 = vld [vmem:[%s0] sm:$0xff]
  %v22 = vld [vmem:[%s0 + $0x8] sm:$0xff]
  %v23 = vpack.c.bf16 %v22, %v21
  %v24 = vld [vmem:[%s1] sm:$0xf]
  %v25 = vld [vmem:[%s1 + $0x4] sm:$0xf]
  %v26 = vld [vmem:[%s1 + $0x8] sm:$0xf]
  %v27 = vld [vmem:[%s1 + $0xc] sm:$0xf]
  %v28 = vld [vmem:[%s1 + $0x10] sm:$0xf]
  %v29 = vld [vmem:[%s1 + $0x14] sm:$0xf]
  %v30 = vld [vmem:[%s1 + $0x18] sm:$0xf]
  %v31 = vld [vmem:[%s1 + $0x1c] sm:$0xf]
  %v32 = vld [vmem:[%s1 + $0x20] sm:$0xf]
  %v33 = vld [vmem:[%s1 + $0x24] sm:$0xf]
  %v34 = vld [vmem:[%s1 + $0x28] sm:$0xf]
  %v35 = vld [vmem:[%s1 + $0x2c] sm:$0xf]
  %v36 = vld [vmem:[%s1 + $0x30] sm:$0xf]
  %v37 = vld [vmem:[%s1 + $0x34] sm:$0xf]
  %v38 = vld [vmem:[%s1 + $0x38] sm:$0xf]
  %v39 = vld [vmem:[%s1 + $0x3c] sm:$0xf]
  %v40 = vld [vmem:[%s2] sm:$0x1]
  %v42 = vperm.slane %v40, 0
  %v60 = vunpack.c.l.b16 %v24
  %v61 = vunpack.c.l.b16 %v25
  %v62 = vunpack.c.l.b16 %v26
  %v63 = vunpack.c.l.b16 %v27
  %v64 = vunpack.c.l.b16 %v28
  %v65 = vunpack.c.l.b16 %v29
  %v66 = vunpack.c.l.b16 %v30
  %v67 = vunpack.c.l.b16 %v31
  %v68 = vunpack.c.l.b16 %v32
  %v69 = vunpack.c.l.b16 %v33
  %v70 = vunpack.c.l.b16 %v34
  %v71 = vunpack.c.l.b16 %v35
  %v72 = vunpack.c.l.b16 %v36
  %v73 = vunpack.c.l.b16 %v37
  %v74 = vunpack.c.l.b16 %v38
  %v75 = vunpack.c.l.b16 %v39
  %v76 = vpack.c.b16 %v61, %v60
  %v77 = vpack.c.b16 %v63, %v62
  %v78 = vpack.c.b16 %v65, %v64
  %v79 = vpack.c.b16 %v67, %v66
  %v80 = vpack.c.b16 %v69, %v68
  %v81 = vpack.c.b16 %v71, %v70
  %v82 = vpack.c.b16 %v73, %v72
  %v83 = vpack.c.b16 %v75, %v74
  %92 = vmatpush.bf16.msra.mxu0 %v83
  %93 = vmatpush.bf16.msra.mxu0 %v82
  %94 = vmatpush.bf16.msra.mxu0 %v81
  %95 = vmatpush.bf16.msra.mxu0 %v80
  %96 = vmatpush.bf16.msra.mxu0 %v79
  %97 = vmatpush.bf16.msra.mxu0 %v78
  %98 = vmatpush.bf16.msra.mxu0 %v77
  %99 = vmatpush.bf16.msra.mxu0 %v76
  %100 = vmatmul.bf16.gmra.mxu0 %v23
  %v101 = vpop.f32.mrf.mxu0
  %v102 = vadd.f32 %v42, %v101
  %v103 = vpop.f32.mrf.mxu0
  %v104 = vadd.f32 %v42, %v103
  %105 = vdwg.mxu0
  %v106 = vmax.f32 %v102, 0.0
  %v107 = vmax.f32 %v104, 0.0
  %v108 = vpack.c.bf16 %v107, %v106
  %v109 = vld [vmem:[%s3] sm:$0xf]
  %v110 = vld [vmem:[%s3 + $0x4] sm:$0xf]
  %v111 = vld [vmem:[%s3 + $0x8] sm:$0xf]
  %v112 = vld [vmem:[%s3 + $0xc] sm:$0xf]
  %v113 = vld [vmem:[%s4] sm:$0x1]
  %v115 = vperm.slane %v113, 0
  %v121 = vunpack.c.l.b16 %v109
  %v122 = vunpack.c.l.b16 %v110
  %v123 = vunpack.c.l.b16 %v111
  %v124 = vunpack.c.l.b16 %v112
  %v125 = vpack.c.b16 %v122, %v121
  %v126 = vpack.c.b16 %v124, %v123
  %vm129 = vcmask 261120
  %v131 = vsel %vm129, %v108, 0
  %133 = vmatpush.bf16.msra.mxu0 0
  %134 = vmatpush.bf16.msra.mxu0 0
  %135 = vmatpush.bf16.msra.mxu0 0
  %136 = vmatpush.bf16.msra.mxu0 0
  %137 = vmatpush.bf16.msra.mxu0 0
  %138 = vmatpush.bf16.msra.mxu0 0
  %139 = vmatpush.bf16.msra.mxu0 %v126
  %140 = vmatpush.bf16.msra.mxu0 %v125
  %141 = vmatmul.bf16.gmra.mxu0 %v131
  %v142 = vpop.f32.mrf.mxu0
  %v143 = vadd.f32 %v115, %v142
  %v144 = vpop.f32.mrf.mxu0
  %v145 = vadd.f32 %v115, %v144
  %146 = vdwg.mxu0
  %147 = vst [vmem:[%s5] sm:$0xff] %v143
  %148 = vst [vmem:[%s5 + $0x8] sm:$0xff] %v145
  // Predicated region
  $region22: #{_lambda_.13} parent=0 // pred_check
    _
  $region23: #{_lambda_.13} parent=0 // pred_check_branch
    %150 = sbr.rel (0) target = $region25
  $region24: #{_lambda_.13} parent=0 // pred_region
    _
  $region25: #{_lambda_.13} parent=0 // pred_fallthru
    _
  // Predicated region
  $region26: #{_lambda_.13} parent=0 // pred_check
    _
  $region27: #{_lambda_.13} parent=0 // pred_check_branch
    %152 = sbr.rel (0) target = $region29
  $region28: #{_lambda_.13} parent=0 // pred_region
    _
  $region29: #{_lambda_.13} parent=0 // pred_fallthru
    _

</llo_original>
